<compile_context>
chip_gen: v7x
topology: tpu7x:2x2x1
jax: 0.10.0
libtpu: 0.0.40
codegen_flags: <defaults>
</compile_context>

<pallas_src>
import jax
import jax.numpy as jnp
from jax import lax
from jax.experimental import pallas as pl
from jax.experimental.pallas import tpu as pltpu

EPS = 1e-5
LANE = 128


# --------------------------------------------------------------------------
# Kernels (all operate on one batch element per grid step; channel dim padded
# to Cp = multiple of 128 so the lane axis is dense).
# --------------------------------------------------------------------------
def _conv1_kernel(xp_ref, w_ref, y_ref, st_ref):
    # xp_ref: (H+2, W+2, Cp) zero-padded input tile
    # w_ref : (9*Cp, Cp)     conv1 weights, tap-major im2col layout
    # y_ref : (H*W, Cp)      raw conv1 output (pre-BN)
    # st_ref: (2, Cp)        per-tile partial [sum; sum of squares]
    Hp, Wp, Cp = xp_ref.shape
    H, W = Hp - 2, Wp - 2

    xp = xp_ref[...]
    cols = []
    for kh in range(3):
        for kw in range(3):
            cols.append(xp[kh:kh + H, kw:kw + W, :].reshape(H * W, Cp))
    patch = jnp.concatenate(cols, axis=-1)                 # (H*W, 9*Cp)
    acc = jnp.dot(patch, w_ref[...], preferred_element_type=jnp.float32)

    y_ref[...] = acc
    # Fused single-pass BN statistics (sum / sum-of-squares, f32).
    st_ref[0:1, :] = jnp.sum(acc, axis=0, keepdims=True)
    st_ref[1:2, :] = jnp.sum(acc * acc, axis=0, keepdims=True)


def _bnrelu_conv2_kernel(y1_ref, s1_ref, t1_ref, w_ref, y2_ref, st_ref,
                         mid_ref):
    # y1_ref: (H*W, Cp) raw conv1 output
    # s1_ref/t1_ref: (1, Cp) folded BN1 scale/shift (gamma*rsqrt(var+eps), ...)
    # w_ref : (9*Cp, Cp) conv2 weights (im2col layout)
    # y2_ref: (H*W, Cp) raw conv2 output (pre-BN)
    # st_ref: (2, Cp)   per-tile partial [sum; sum of squares]
    # mid_ref: (H+2, W+2, Cp) VMEM scratch holding the padded BN1+ReLU output
    Hp, Wp, Cp = mid_ref.shape
    H, W = Hp - 2, Wp - 2

    # BN1 affine + ReLU, fully lane-dense.
    y = jnp.maximum(y1_ref[...] * s1_ref[...] + t1_ref[...], 0.0)

    # Zero only the halo strips (not the full tensor); interior written once.
    zrow = jnp.zeros((1, Wp, Cp), jnp.float32)
    mid_ref[0:1, :, :] = zrow
    mid_ref[Hp - 1:Hp, :, :] = zrow
    zcol = jnp.zeros((Hp, 1, Cp), jnp.float32)
    mid_ref[:, 0:1, :] = zcol
    mid_ref[:, Wp - 1:Wp, :] = zcol
    mid_ref[1:1 + H, 1:1 + W, :] = y.reshape(H, W, Cp)

    mid = mid_ref[...]
    cols = []
    for kh in range(3):
        for kw in range(3):
            cols.append(mid[kh:kh + H, kw:kw + W, :].reshape(H * W, Cp))
    patch = jnp.concatenate(cols, axis=-1)                 # (H*W, 9*Cp)
    acc = jnp.dot(patch, w_ref[...], preferred_element_type=jnp.float32)

    y2_ref[...] = acc
    st_ref[0:1, :] = jnp.sum(acc, axis=0, keepdims=True)
    st_ref[1:2, :] = jnp.sum(acc * acc, axis=0, keepdims=True)


def _bn2_residual_kernel(y2_ref, x_ref, s2_ref, t2_ref, o_ref):
    # Elementwise finalize: BN2 affine + residual add + ReLU (lane-dense).
    o_ref[...] = jnp.maximum(
        y2_ref[...] * s2_ref[...] + t2_ref[...] + x_ref[...], 0.0)


# --------------------------------------------------------------------------
# Wrapper
# --------------------------------------------------------------------------
def residual_block(x_nhwc, params):
    """x_nhwc: (B, H, W, C) float32. Returns (B, H, W, C) float32."""
    w1, b1, g1, be1, w2, b2, g2, be2 = params  # conv biases unused (see note)
    B, H, W, Cin = x_nhwc.shape
    Cout = w1.shape[-1]
    assert Cin == Cout, "stride=1 / downsample=None requires Cin == Cout"
    C = Cout
    Cp = ((C + LANE - 1) // LANE) * LANE       # pad channels to lane width
    Hp, Wp = H + 2, W + 2
    n = B * H * W
    f32 = jnp.float32

    # ---- layout plumbing (plain JAX, done once) ----
    x_c = jnp.pad(x_nhwc.astype(f32), ((0, 0), (0, 0), (0, 0), (0, Cp - C)))
    xp = jnp.pad(x_c, ((0, 0), (1, 1), (1, 1), (0, 0)))     # (B, Hp, Wp, Cp)

    def pack_w(w):  # (9, C, C) -> (9*Cp, Cp), tap-major im2col layout
        wp = jnp.pad(w.astype(f32), ((0, 0), (0, Cp - C), (0, Cp - C)))
        return wp.reshape(9 * Cp, Cp)

    w1p, w2p = pack_w(w1), pack_w(w2)
    # NOTE: conv biases b1/b2 are intentionally not applied inside the
    # kernels: a per-channel constant before training-mode BN is exactly
    # cancelled by the mean subtraction.

    grid = (B,)
    cparams = pltpu.CompilerParams(
        dimension_semantics=("parallel",),
        vmem_limit_bytes=32 * 1024 * 1024)     # re-derive per gen / tile size

    conv_flops = 2 * n * 9 * Cp * Cp
    conv_bytes = 4 * (B * Hp * Wp * Cp + 9 * Cp * Cp + n * Cp + 2 * B * Cp)
    cost = pl.CostEstimate(flops=conv_flops, transcendentals=0,
                           bytes_accessed=conv_bytes)

    xp_spec = pl.BlockSpec((None, Hp, Wp, Cp), lambda b: (b, 0, 0, 0))
    w_spec = pl.BlockSpec((9 * Cp, Cp), lambda b: (0, 0))
    act_spec = pl.BlockSpec((None, H * W, Cp), lambda b: (b, 0, 0))
    st_spec = pl.BlockSpec((None, 2, Cp), lambda b: (b, 0, 0))
    vec_spec = pl.BlockSpec((1, Cp), lambda b: (0, 0))

    # ---- pass 1: conv1 + partial BN1 statistics ----
    y1, st1 = pl.pallas_call(
        _conv1_kernel,
        out_shape=(jax.ShapeDtypeStruct((B, H * W, Cp), f32),
                   jax.ShapeDtypeStruct((B, 2, Cp), f32)),
        grid=grid,
        in_specs=[xp_spec, w_spec],
        out_specs=(act_spec, st_spec),
        compiler_params=cparams,
        cost_estimate=cost,
    )(xp, w1p)

    def bn_affine(stats, gamma, beta):
        # Reduce per-tile partial stats; fold BN into per-channel scale/shift.
        tot = jnp.sum(stats, axis=0)                       # (2, Cp)
        mean = tot[0] / n
        # E[x^2] - mean^2 in f32 (single fused pass; fine at these magnitudes)
        var = jnp.maximum(tot[1] / n - mean * mean, 0.0)
        gp = jnp.pad(gamma.reshape(-1).astype(f32), (0, Cp - C))
        bp = jnp.pad(beta.reshape(-1).astype(f32), (0, Cp - C))
        scale = gp * lax.rsqrt(var + EPS)
        shift = bp - mean * scale
        return scale.reshape(1, Cp), shift.reshape(1, Cp)

    s1, t1 = bn_affine(st1, g1, be1)

    # ---- pass 2: BN1 affine + ReLU + conv2 + partial BN2 statistics ----
    y2, st2 = pl.pallas_call(
        _bnrelu_conv2_kernel,
        out_shape=(jax.ShapeDtypeStruct((B, H * W, Cp), f32),
                   jax.ShapeDtypeStruct((B, 2, Cp), f32)),
        grid=grid,
        in_specs=[act_spec, vec_spec, vec_spec, w_spec],
        out_specs=(act_spec, st_spec),
        scratch_shapes=[pltpu.VMEM((Hp, Wp, Cp), f32)],
        compiler_params=cparams,
        cost_estimate=pl.CostEstimate(flops=conv_flops + 4 * n * Cp,
                                      transcendentals=0,
                                      bytes_accessed=conv_bytes + 4 * n * Cp),
    )(y1, s1, t1, w2p)

    s2, t2 = bn_affine(st2, g2, be2)

    # ---- pass 3: BN2 affine + residual add + ReLU ----
    x_flat = x_c.reshape(B, H * W, Cp)
    out = pl.pallas_call(
        _bn2_residual_kernel,
        out_shape=jax.ShapeDtypeStruct((B, H * W, Cp), f32),
        grid=grid,
        in_specs=[act_spec, act_spec, vec_spec, vec_spec],
        out_specs=act_spec,
        compiler_params=cparams,
    )(y2, x_flat, s2, t2)

    return out.reshape(B, H, W, Cp)[..., :C]


# --------------------------------------------------------------------------
# Pure-JAX reference (full-fidelity PyTorch semantics, incl. conv biases)
# --------------------------------------------------------------------------
def residual_block_reference(x_nhwc, params):
    w1, b1, g1, be1, w2, b2, g2, be2 = params

    def conv(x, w_flat, b):
        cin, cout = w_flat.shape[1], w_flat.shape[2]
        w = w_flat.reshape(3, 3, cin, cout)
        y = lax.conv_general_dilated(
            x, w, window_strides=(1, 1), padding=((1, 1), (1, 1)),
            dimension_numbers=("NHWC", "HWIO", "NHWC"))
        return y + b.reshape(1, 1, 1, -1)

    def bn(x, g, be):
        m = x.mean(axis=(0, 1, 2), keepdims=True)
        v = ((x - m) ** 2).mean(axis=(0, 1, 2), keepdims=True)
        return (x - m) * lax.rsqrt(v + EPS) * g.reshape(1, 1, 1, -1) \
            + be.reshape(1, 1, 1, -1)

    y = jnp.maximum(bn(conv(x_nhwc, w1, b1), g1, be1), 0.0)
    z = bn(conv(y, w2, b2), g2, be2)
    return jnp.maximum(z + x_nhwc, 0.0)


if __name__ == "__main__":
    key = jax.random.PRNGKey(0)
    B, C, H, W = 2, 4, 16, 16      # in_channels == out_channels, stride=1
    ks = jax.random.split(key, 5)

    # PyTorch-style NCHW input, transposed to the kernel's NHWC layout.
    x_nchw = jax.random.normal(ks[0], (B, C, H, W), jnp.float32)
    x_nhwc = jnp.transpose(x_nchw, (0, 2, 3, 1))

    Cin = Cout = C
    w1 = 0.1 * jax.random.normal(ks[1], (9, Cin, Cout), jnp.float32)
    b1 = 0.05 * jax.random.normal(ks[2], (1, Cout), jnp.float32)
    g1 = jnp.ones((1, Cout), jnp.float32)      # BN gamma init
    be1 = jnp.zeros((1, Cout), jnp.float32)    # BN beta init
    w2 = 0.1 * jax.random.normal(ks[3], (9, Cout, Cout), jnp.float32)
    b2 = 0.05 * jax.random.normal(ks[4], (1, Cout), jnp.float32)
    g2 = jnp.ones((1, Cout), jnp.float32)
    be2 = jnp.zeros((1, Cout), jnp.float32)
    params = (w1, b1, g1, be1, w2, b2, g2, be2)

    out = residual_block(x_nhwc, params)
    jax.block_until_ready(out)

    ref = residual_block_reference(x_nhwc, params)
    err = float(jnp.max(jnp.abs(out - ref)))
    assert jnp.allclose(out, ref, atol=5e-4, rtol=5e-4), f"max abs err {err}"

    print("KERNEL_OK")
</pallas_src>

<mosaic_0001>
module attributes {stable_mosaic.version = 11 : i64} {
  func.func @_conv1_kernel(%arg0: i32, %arg1: memref<1x18x18x128xf32, #tpu.memory_space<vmem>>, %arg2: memref<1152x128xf32, #tpu.memory_space<vmem>>, %arg3: memref<1x256x128xf32, #tpu.memory_space<vmem>>, %arg4: memref<1x2x128xf32, #tpu.memory_space<vmem>>) attributes {dimension_semantics = [#tpu.dimension_semantics<parallel>], iteration_bounds = array<i64: 2>, scalar_prefetch = 0 : i64, scratch_operands = 0 : i64, tpu.core_type = #tpu.core_type<tc>, window_params = [{transform_indices = @transform_0, window_bounds = array<i64: 1, 18, 18, 128>}, {pipeline_mode = #tpu.pipeline_mode<synchronous>, transform_indices = @transform_1, window_bounds = array<i64: 1152, 128>}, {transform_indices = @transform_2, window_bounds = array<i64: 1, 256, 128>}, {transform_indices = @transform_3, window_bounds = array<i64: 1, 2, 128>}]} {
    %c0 = arith.constant 0 : index
    %c0_0 = arith.constant 0 : index
    %c0_1 = arith.constant 0 : index
    %c0_2 = arith.constant 0 : index
    %0 = vector.load %arg1[%c0, %c0_0, %c0_1, %c0_2] : memref<1x18x18x128xf32, #tpu.memory_space<vmem>>, vector<1x18x18x128xf32>
    %1 = vector.shape_cast %0 : vector<1x18x18x128xf32> to vector<18x18x128xf32>
    %2 = vector.extract_strided_slice %1 {offsets = [0, 0, 0], sizes = [16, 16, 128], strides = [1, 1, 1]} : vector<18x18x128xf32> to vector<16x16x128xf32>
    %3 = vector.shape_cast %2 : vector<16x16x128xf32> to vector<256x128xf32>
    %4 = vector.extract_strided_slice %1 {offsets = [0, 1, 0], sizes = [16, 16, 128], strides = [1, 1, 1]} : vector<18x18x128xf32> to vector<16x16x128xf32>
    %5 = vector.shape_cast %4 : vector<16x16x128xf32> to vector<256x128xf32>
    %6 = vector.extract_strided_slice %1 {offsets = [0, 2, 0], sizes = [16, 16, 128], strides = [1, 1, 1]} : vector<18x18x128xf32> to vector<16x16x128xf32>
    %7 = vector.shape_cast %6 : vector<16x16x128xf32> to vector<256x128xf32>
    %8 = vector.extract_strided_slice %1 {offsets = [1, 0, 0], sizes = [16, 16, 128], strides = [1, 1, 1]} : vector<18x18x128xf32> to vector<16x16x128xf32>
    %9 = vector.shape_cast %8 : vector<16x16x128xf32> to vector<256x128xf32>
    %10 = vector.extract_strided_slice %1 {offsets = [1, 1, 0], sizes = [16, 16, 128], strides = [1, 1, 1]} : vector<18x18x128xf32> to vector<16x16x128xf32>
    %11 = vector.shape_cast %10 : vector<16x16x128xf32> to vector<256x128xf32>
    %12 = vector.extract_strided_slice %1 {offsets = [1, 2, 0], sizes = [16, 16, 128], strides = [1, 1, 1]} : vector<18x18x128xf32> to vector<16x16x128xf32>
    %13 = vector.shape_cast %12 : vector<16x16x128xf32> to vector<256x128xf32>
    %14 = vector.extract_strided_slice %1 {offsets = [2, 0, 0], sizes = [16, 16, 128], strides = [1, 1, 1]} : vector<18x18x128xf32> to vector<16x16x128xf32>
    %15 = vector.shape_cast %14 : vector<16x16x128xf32> to vector<256x128xf32>
    %16 = vector.extract_strided_slice %1 {offsets = [2, 1, 0], sizes = [16, 16, 128], strides = [1, 1, 1]} : vector<18x18x128xf32> to vector<16x16x128xf32>
    %17 = vector.shape_cast %16 : vector<16x16x128xf32> to vector<256x128xf32>
    %18 = vector.extract_strided_slice %1 {offsets = [2, 2, 0], sizes = [16, 16, 128], strides = [1, 1, 1]} : vector<18x18x128xf32> to vector<16x16x128xf32>
    %19 = vector.shape_cast %18 : vector<16x16x128xf32> to vector<256x128xf32>
    %20 = tpu.concatenate %3, %5, %7, %9, %11, %13, %15, %17, %19 in 1 : vector<256x128xf32>, vector<256x128xf32>, vector<256x128xf32>, vector<256x128xf32>, vector<256x128xf32>, vector<256x128xf32>, vector<256x128xf32>, vector<256x128xf32>, vector<256x128xf32> -> vector<256x1152xf32>
    %c0_3 = arith.constant 0 : index
    %c0_4 = arith.constant 0 : index
    %21 = vector.load %arg2[%c0_3, %c0_4] : memref<1152x128xf32, #tpu.memory_space<vmem>>, vector<1152x128xf32>
    %cst = arith.constant dense<0.000000e+00> : vector<256x128xf32>
    %22 = tpu.matmul %20, %21, %cst {dimension_numbers = #tpu.dot_dimension_numbers<[1], [0], [0], [1], [0, 0, 1, 1], [], []>} : vector<256x1152xf32>, vector<1152x128xf32>, vector<256x128xf32> -> vector<256x128xf32>
    %c0_5 = arith.constant 0 : index
    %c0_6 = arith.constant 0 : index
    %c0_7 = arith.constant 0 : index
    %23 = vector.load %arg3[%c0_5, %c0_6, %c0_7] : memref<1x256x128xf32, #tpu.memory_space<vmem>>, vector<1x256x128xf32>
    %24 = vector.shape_cast %23 : vector<1x256x128xf32> to vector<256x128xf32>
    %25 = vector.shape_cast %22 : vector<256x128xf32> to vector<1x256x128xf32>
    tpu.vector_store %arg3[%c0_5, %c0_6, %c0_7], %25 {strides = array<i32>} : memref<1x256x128xf32, #tpu.memory_space<vmem>>, vector<1x256x128xf32>,
    %cst_8 = arith.constant dense<0.000000e+00> : vector<128xf32>
    %26 = vector.multi_reduction <add>, %22, %cst_8 [0] : vector<256x128xf32> to vector<128xf32>
    %27 = vector.shape_cast %26 : vector<128xf32> to vector<1x128xf32>
    %c0_9 = arith.constant 0 : index
    %c0_10 = arith.constant 0 : index
    %c0_11 = arith.constant 0 : index
    %28 = vector.load %arg4[%c0_9, %c0_10, %c0_11] : memref<1x2x128xf32, #tpu.memory_space<vmem>>, vector<1x1x128xf32>
    %29 = vector.shape_cast %28 : vector<1x1x128xf32> to vector<1x128xf32>
    %30 = vector.shape_cast %27 : vector<1x128xf32> to vector<1x1x128xf32>
    tpu.vector_store %arg4[%c0_9, %c0_10, %c0_11], %30 {strides = array<i32>} : memref<1x2x128xf32, #tpu.memory_space<vmem>>, vector<1x1x128xf32>,
    %31 = arith.mulf %22, %22 : vector<256x128xf32>
    %cst_12 = arith.constant dense<0.000000e+00> : vector<128xf32>
    %32 = vector.multi_reduction <add>, %31, %cst_12 [0] : vector<256x128xf32> to vector<128xf32>
    %33 = vector.shape_cast %32 : vector<128xf32> to vector<1x128xf32>
    %c0_13 = arith.constant 0 : index
    %c1 = arith.constant 1 : index
    %c0_14 = arith.constant 0 : index
    %34 = vector.load %arg4[%c0_13, %c1, %c0_14] : memref<1x2x128xf32, #tpu.memory_space<vmem>>, vector<1x1x128xf32>
    %35 = vector.shape_cast %34 : vector<1x1x128xf32> to vector<1x128xf32>
    %36 = vector.shape_cast %33 : vector<1x128xf32> to vector<1x1x128xf32>
    tpu.vector_store %arg4[%c0_13, %c1, %c0_14], %36 {strides = array<i32>} : memref<1x2x128xf32, #tpu.memory_space<vmem>>, vector<1x1x128xf32>,
    return
  }
  func.func @transform_0(%arg0: i32) -> (i32, i32, i32, i32) {
    %c0_i32 = arith.constant 0 : i32
    %c0_i32_0 = arith.constant 0 : i32
    %c0_i32_1 = arith.constant 0 : i32
    %c0_i32_2 = arith.constant 0 : i32
    return %arg0, %c0_i32, %c0_i32_0, %c0_i32_1 : i32, i32, i32, i32
  }
  func.func @transform_1(%arg0: i32) -> (i32, i32) {
    %c0_i32 = arith.constant 0 : i32
    %c0_i32_0 = arith.constant 0 : i32
    %c0_i32_1 = arith.constant 0 : i32
    return %c0_i32, %c0_i32_0 : i32, i32
  }
  func.func @transform_2(%arg0: i32) -> (i32, i32, i32) {
    %c0_i32 = arith.constant 0 : i32
    %c0_i32_0 = arith.constant 0 : i32
    %c0_i32_1 = arith.constant 0 : i32
    return %arg0, %c0_i32, %c0_i32_0 : i32, i32, i32
  }
  func.func @transform_3(%arg0: i32) -> (i32, i32, i32) {
    %c0_i32 = arith.constant 0 : i32
    %c0_i32_0 = arith.constant 0 : i32
    %c0_i32_1 = arith.constant 0 : i32
    return %arg0, %c0_i32, %c0_i32_0 : i32, i32, i32
  }
}

</mosaic_0001>

<llo_original>
// kernel: tpu_custom_call.1
$region0: #{tpu_custom_call.1}
  #allocation0 [shape = 'u32[]', space=smem, size = 0x4, offset = 0x4, fixed_abs, tag = 'smem constant byte address 0x4 - core index']
  #allocation1 [shape = 'u32[144,128]{1,0:T(1,128)}', space=vmem, size = 0x12000, scoped, tag = 'internal scratch']
  %s0 = inlined_call_operand.vmem [shape: f32[2,18,18,128], index: 0, kind: input, shape index: {}]
  %s1 = inlined_call_operand.vmem [shape: f32[1152,128], index: 1, kind: input, shape index: {}]
  %s2 = inlined_call_operand.hbm [shape: f32[2,256,128], index: 2, kind: output, shape index: {0}]
  %s3 = inlined_call_operand.hbm [shape: f32[2,2,128], index: 3, kind: output, shape index: {1}]
  %4 = xla_tuple %s2, %s3
  %s5 = sld [smem:[#allocation0]]
  $region49: #{tpu_custom_call.1} parent=0
    _
  %s7 = ssub.s32 1, %s5
  %s8 = scalar_select 0, %s7, %s5
  $region1: #{tpu_custom_call.1} parent=0
    #allocation2 [shape = 'u8[262144]{0}', space=vmem, size = 0x40000, scoped, tag = 'output window, operand 0']
    #allocation3 [shape = 's32[2]{0}', space=sflag, size = 0x8, scoped, tag = 'scoped memory for tpu_custom_call.1']
    #allocation4 [shape = 'u8[2048]{0}', space=vmem, size = 0x800, scoped, tag = 'output window, operand 1']
    #allocation5 [shape = 's32[2]{0}', space=sflag, size = 0x8, scoped, tag = 'scoped memory for tpu_custom_call.1']
    %9 = vsyncpa [#allocation3], 0
    %s10 = scalar_lea.sflag [#allocation3], 1
    %11 = vsyncpa %s10, 0
    %12 = vsyncpa [#allocation5], 0
    %s13 = scalar_lea.sflag [#allocation5], 1
    %14 = vsyncpa %s13, 0
    loop: start=0, step=1, limit=4
    $region2: #{tpu_custom_call.1} parent=1 // loop_pre_header
      _
    $region3: #{tpu_custom_call.1} parent=1 // loop_header
      %s16 = sphi 0, %s20
      %p17 = scmp.ge.s32.totalorder %s16, 4
      %s26 = sphi 0, %s28
      %s29 = sphi 0, %s26
      %s30 = sphi 0, %s29
      %s46 = sphi 0, %s30
      %s50 = sphi 0, %s50
      %s52 = sphi 0, %s50
      %s53 = sphi 0, %s52
      %s67 = sphi 0, %s53
      %s73 = sphi 0, %s75
      %s76 = sphi 0, %s73
      %s77 = sphi 0, %s76
      %s93 = sphi 0, %s77
      %s99 = sphi 0, %s101
      %s102 = sphi 0, %s99
      %s103 = sphi 0, %s102
      %s119 = sphi 0, %s103
    $region4: #{tpu_custom_call.1} parent=1 // loop_header_branch
      %19 = sbr.rel (%p17) target = $region8
    $region5: #{tpu_custom_call.1} parent=1 // loop_body
      %s21 = ssub.s32 %s16, 1
      %s22 = ssub.s32 %s16, 2
      %s23 = sadd.s32 %s16, 1
      %s24 = ssub.s32 %s16, %s23
      %p25 = scmp.eq.s32.totalorder %s24, 0
      %s27 = sadd.s32 %s26, 1
      %s28 = scalar_select %p25, %s26, %s27
      %p31 = pneg %p25
      %p32 = scmp.eq.s32.totalorder %s16, 1
      %p33 = por %p31, %p32
      %p34 = scmp.ne.s32.totalorder %s26, %s29
      %p35 = scmp.eq.s32.totalorder %s16, 0
      %p36 = por %p34, %p35
      %p37 = scmp.ne.s32.totalorder %s26, %s29
      %p38 = scmp.eq.s32.totalorder %s21, 1
      %p39 = por %p37, %p38
      %p40 = scmp.ne.s32.totalorder %s29, %s30
      %p41 = scmp.eq.s32.totalorder %s21, 0
      %p42 = por %p40, %p41
      %p43 = scmp.ne.s32.totalorder %s29, %s30
      %p44 = scmp.eq.s32.totalorder %s22, 1
      %p45 = por %p43, %p44
      %p47 = scmp.ne.s32.totalorder %s30, %s46
      %p48 = scmp.eq.s32.totalorder %s22, 0
      %p49 = por %p47, %p48
      %s51 = sadd.s32 %s50, 1
      %p54 = scmp.eq.s32.totalorder %s16, 1
      %p55 = scmp.ne.s32.totalorder %s50, %s52
      %p56 = scmp.eq.s32.totalorder %s16, 0
      %p57 = por %p55, %p56
      %p58 = scmp.ne.s32.totalorder %s50, %s52
      %p59 = scmp.eq.s32.totalorder %s21, 1
      %p60 = por %p58, %p59
      %p61 = scmp.ne.s32.totalorder %s52, %s53
      %p62 = scmp.eq.s32.totalorder %s21, 0
      %p63 = por %p61, %p62
      %p64 = scmp.ne.s32.totalorder %s52, %s53
      %p65 = scmp.eq.s32.totalorder %s22, 1
      %p66 = por %p64, %p65
      %p68 = scmp.ne.s32.totalorder %s53, %s67
      %p69 = scmp.eq.s32.totalorder %s22, 0
      %p70 = por %p68, %p69
      %s71 = ssub.s32 %s16, %s23
      %p72 = scmp.eq.s32.totalorder %s71, 0
      %s74 = sadd.s32 %s73, 1
      %s75 = scalar_select %p72, %s73, %s74
      %p78 = pneg %p72
      %p79 = scmp.eq.s32.totalorder %s16, 1
      %p80 = por %p78, %p79
      %p81 = scmp.ne.s32.totalorder %s73, %s76
      %p82 = scmp.eq.s32.totalorder %s16, 0
      %p83 = por %p81, %p82
      %p84 = scmp.ne.s32.totalorder %s73, %s76
      %p85 = scmp.eq.s32.totalorder %s21, 1
      %p86 = por %p84, %p85
      %p87 = scmp.ne.s32.totalorder %s76, %s77
      %p88 = scmp.eq.s32.totalorder %s21, 0
      %p89 = por %p87, %p88
      %p90 = scmp.ne.s32.totalorder %s76, %s77
      %p91 = scmp.eq.s32.totalorder %s22, 1
      %p92 = por %p90, %p91
      %p94 = scmp.ne.s32.totalorder %s77, %s93
      %p95 = scmp.eq.s32.totalorder %s22, 0
      %p96 = por %p94, %p95
      %s97 = ssub.s32 %s16, %s23
      %p98 = scmp.eq.s32.totalorder %s97, 0
      %s100 = sadd.s32 %s99, 1
      %s101 = scalar_select %p98, %s99, %s100
      %p104 = pneg %p98
      %p105 = scmp.eq.s32.totalorder %s16, 1
      %p106 = por %p104, %p105
      %p107 = scmp.ne.s32.totalorder %s99, %s102
      %p108 = scmp.eq.s32.totalorder %s16, 0
      %p109 = por %p107, %p108
      %p110 = scmp.ne.s32.totalorder %s99, %s102
      %p111 = scmp.eq.s32.totalorder %s21, 1
      %p112 = por %p110, %p111
      %p113 = scmp.ne.s32.totalorder %s102, %s103
      %p114 = scmp.eq.s32.totalorder %s21, 0
      %p115 = por %p113, %p114
      %p116 = scmp.ne.s32.totalorder %s102, %s103
      %p117 = scmp.eq.s32.totalorder %s22, 1
      %p118 = por %p116, %p117
      %p120 = scmp.ne.s32.totalorder %s103, %s119
      %p121 = scmp.eq.s32.totalorder %s22, 0
      %p122 = por %p120, %p121
      %p123 = scmp.le.s32.totalorder 1, %s16
      %p124 = scmp.lt.s32.totalorder %s16, 3
      %p125 = pnand %p123, %p124
      %p126 = pneg %p125
      // Predicated region
      $region9: #{tpu_custom_call.1} parent=5 // pred_check
        _
      $region10: #{tpu_custom_call.1} parent=5 // pred_check_branch
        %128 = sbr.rel (%p125) target = $region12
      $region11: #{tpu_custom_call.1} parent=5 // pred_region
        %s129 = ssub.s32 %s16, 1
        // Predicated region
        $region13: #{tpu_custom_call.1} parent=11 // pred_check
          %p130 = pneg %p63
        $region14: #{tpu_custom_call.1} parent=11 // pred_check_branch
          %132 = sbr.rel (%p130) target = $region16
        $region15: #{tpu_custom_call.1} parent=11 // pred_region
          _
        $region16: #{tpu_custom_call.1} parent=11 // pred_fallthru
          _
      $region12: #{tpu_custom_call.1} parent=5 // pred_fallthru
        _
      %p133 = scmp.lt.s32.totalorder %s16, 2
      // Predicated region
      $region17: #{tpu_custom_call.1} parent=5 // pred_check
        %p134 = pneg %p133
      $region18: #{tpu_custom_call.1} parent=5 // pred_check_branch
        %136 = sbr.rel (%p134) target = $region20
      $region19: #{tpu_custom_call.1} parent=5 // pred_region
        // Predicated region
        $region21: #{tpu_custom_call.1} parent=19 // pred_check
          %p137 = pneg %p36
        $region22: #{tpu_custom_call.1} parent=19 // pred_check_branch
          %139 = sbr.rel (%p137) target = $region24
        $region23: #{tpu_custom_call.1} parent=19 // pred_region
          %p140 = scmp.lt.s32.totalorder %s16, 1
          %s141 = scalar_select %p140, %s16, 1
          %s142 = smul.addr %s141, 54
          %s143 = smul.addr %s142, 8
          %s144 = scalar_lea.vmem %s0, %s143
        $region24: #{tpu_custom_call.1} parent=19 // pred_fallthru
          _
      $region20: #{tpu_custom_call.1} parent=5 // pred_fallthru
        _
      %p145 = scmp.le.s32.totalorder 1, %s16
      %p146 = scmp.lt.s32.totalorder %s16, 3
      %p147 = pnand %p145, %p146
      %p148 = pneg %p147
      // Predicated region
      $region25: #{tpu_custom_call.1} parent=5 // pred_check
        _
      $region26: #{tpu_custom_call.1} parent=5 // pred_check_branch
        %150 = sbr.rel (%p147) target = $region28
      $region27: #{tpu_custom_call.1} parent=5 // pred_region
        %s151 = ssub.s32 %s16, 1
        %p152 = scmp.lt.s32.totalorder %s21, 1
        %s153 = scalar_select %p152, %s21, 1
        %s154 = smul.addr %s153, 54
        %s155 = smul.addr %s154, 8
        %s156 = scalar_lea.vmem %s0, %s155
        %p157 = pneg %p42
        %p158 = pneg %p39
        %p159 = pneg %p63
        %p160 = pneg %p60
        %p161 = pneg %p89
        %p162 = pneg %p86
        %s163 = sand.u32 %s76, 1
        %s164 = scalar_lea.sflag [#allocation3], %s163
        %s165 = sand.u32 %s76, 1
        %s166 = smul.addr %s165, 256
        %s167 = scalar_lea.vmem [#allocation2], %s166
        %p168 = pneg %p115
        %p169 = pneg %p112
        %s170 = sand.u32 %s102, 1
        %s171 = scalar_lea.sflag [#allocation5], %s170
        %s172 = sand.u32 %s102, 1
        %s173 = smul.addr %s172, 2
        %s174 = scalar_lea.vmem [#allocation4], %s173
        %p175 = scmp.lt.s32.totalorder %s21, 1
        %s176 = scalar_select %p175, %s21, 1
        %s177 = smul.addr %s176, 54
        %s178 = smul.addr %s177, 8
        %s179 = scalar_lea.vmem %s0, %s178
        %v180 = vld [vmem:[%s179] sm:$0xff]
        %v181 = vld [vmem:[%s179 + $0x8] sm:$0xff]
        %v182 = vld [vmem:[%s179 + $0x10] sm:$0x3]
        %v183 = vld [vmem:[%s179 + $0x18] sm:$0xff]
        %v184 = vld [vmem:[%s179 + $0x20] sm:$0xff]
        %v185 = vld [vmem:[%s179 + $0x28] sm:$0x3]
        %v186 = vld [vmem:[%s179 + $0x30] sm:$0xff]
        %v187 = vld [vmem:[%s179 + $0x38] sm:$0xff]
        %v188 = vld [vmem:[%s179 + $0x40] sm:$0x3]
        %v189 = vld [vmem:[%s179 + $0x48] sm:$0xff]
        %v190 = vld [vmem:[%s179 + $0x50] sm:$0xff]
        %v191 = vld [vmem:[%s179 + $0x58] sm:$0x3]
        %v192 = vld [vmem:[%s179 + $0x60] sm:$0xff]
        %v193 = vld [vmem:[%s179 + $0x68] sm:$0xff]
        %v194 = vld [vmem:[%s179 + $0x70] sm:$0x3]
        %v195 = vld [vmem:[%s179 + $0x78] sm:$0xff]
        %v196 = vld [vmem:[%s179 + $0x80] sm:$0xff]
        %v197 = vld [vmem:[%s179 + $0x88] sm:$0x3]
        %v198 = vld [vmem:[%s179 + $0x90] sm:$0xff]
        %v199 = vld [vmem:[%s179 + $0x98] sm:$0xff]
        %v200 = vld [vmem:[%s179 + $0xa0] sm:$0x3]
        %v201 = vld [vmem:[%s179 + $0xa8] sm:$0xff]
        %v202 = vld [vmem:[%s179 + $0xb0] sm:$0xff]
        %v203 = vld [vmem:[%s179 + $0xb8] sm:$0x3]
        %v204 = vld [vmem:[%s179 + $0xc0] sm:$0xff]
        %v205 = vld [vmem:[%s179 + $0xc8] sm:$0xff]
        %v206 = vld [vmem:[%s179 + $0xd0] sm:$0x3]
        %v207 = vld [vmem:[%s179 + $0xd8] sm:$0xff]
        %v208 = vld [vmem:[%s179 + $0xe0] sm:$0xff]
        %v209 = vld [vmem:[%s179 + $0xe8] sm:$0x3]
        %v210 = vld [vmem:[%s179 + $0xf0] sm:$0xff]
        %v211 = vld [vmem:[%s179 + $0xf8] sm:$0xff]
        %v212 = vld [vmem:[%s179 + $0x100] sm:$0x3]
        %v213 = vld [vmem:[%s179 + $0x108] sm:$0xff]
        %v214 = vld [vmem:[%s179 + $0x110] sm:$0xff]
        %v215 = vld [vmem:[%s179 + $0x118] sm:$0x3]
        %v216 = vld [vmem:[%s179 + $0x120] sm:$0xff]
        %v217 = vld [vmem:[%s179 + $0x128] sm:$0xff]
        %v218 = vld [vmem:[%s179 + $0x130] sm:$0x3]
        %v219 = vld [vmem:[%s179 + $0x138] sm:$0xff]
        %v220 = vld [vmem:[%s179 + $0x140] sm:$0xff]
        %v221 = vld [vmem:[%s179 + $0x148] sm:$0x3]
        %v222 = vld [vmem:[%s179 + $0x150] sm:$0xff]
        %v223 = vld [vmem:[%s179 + $0x158] sm:$0xff]
        %v224 = vld [vmem:[%s179 + $0x160] sm:$0x3]
        %v225 = vld [vmem:[%s179 + $0x168] sm:$0xff]
        %v226 = vld [vmem:[%s179 + $0x170] sm:$0xff]
        %v227 = vld [vmem:[%s179 + $0x178] sm:$0x3]
        %v228 = vld [vmem:[%s179 + $0x180] sm:$0xff]
        %v229 = vld [vmem:[%s179 + $0x188] sm:$0xff]
        %v230 = vld [vmem:[%s179 + $0x190] sm:$0x3]
        %v231 = vld [vmem:[%s179 + $0x198] sm:$0xff]
        %v232 = vld [vmem:[%s179 + $0x1a0] sm:$0xff]
        %v233 = vld [vmem:[%s179 + $0x1a8] sm:$0x3]
        %vm282 = vcmask 1046528
        %v283 = vrot.slane %v180, 1
        %v284 = vrot.slane %v181, 1
        %v285 = vsel %vm282, %v283, %v284
        %v286 = vrot.slane %v182, 1
        %v287 = vsel %vm282, %v284, %v286
        %v288 = vrot.slane %v183, 1
        %v289 = vrot.slane %v184, 1
        %v290 = vsel %vm282, %v288, %v289
        %v291 = vrot.slane %v185, 1
        %v292 = vsel %vm282, %v289, %v291
        %v293 = vrot.slane %v186, 1
        %v294 = vrot.slane %v187, 1
        %v295 = vsel %vm282, %v293, %v294
        %v296 = vrot.slane %v188, 1
        %v297 = vsel %vm282, %v294, %v296
        %v298 = vrot.slane %v189, 1
        %v299 = vrot.slane %v190, 1
        %v300 = vsel %vm282, %v298, %v299
        %v301 = vrot.slane %v191, 1
        %v302 = vsel %vm282, %v299, %v301
        %v303 = vrot.slane %v192, 1
        %v304 = vrot.slane %v193, 1
        %v305 = vsel %vm282, %v303, %v304
        %v306 = vrot.slane %v194, 1
        %v307 = vsel %vm282, %v304, %v306
        %v308 = vrot.slane %v195, 1
        %v309 = vrot.slane %v196, 1
        %v310 = vsel %vm282, %v308, %v309
        %v311 = vrot.slane %v197, 1
        %v312 = vsel %vm282, %v309, %v311
        %v313 = vrot.slane %v198, 1
        %v314 = vrot.slane %v199, 1
        %v315 = vsel %vm282, %v313, %v314
        %v316 = vrot.slane %v200, 1
        %v317 = vsel %vm282, %v314, %v316
        %v318 = vrot.slane %v201, 1
        %v319 = vrot.slane %v202, 1
        %v320 = vsel %vm282, %v318, %v319
        %v321 = vrot.slane %v203, 1
        %v322 = vsel %vm282, %v319, %v321
        %v323 = vrot.slane %v204, 1
        %v324 = vrot.slane %v205, 1
        %v325 = vsel %vm282, %v323, %v324
        %v326 = vrot.slane %v206, 1
        %v327 = vsel %vm282, %v324, %v326
        %v328 = vrot.slane %v207, 1
        %v329 = vrot.slane %v208, 1
        %v330 = vsel %vm282, %v328, %v329
        %v331 = vrot.slane %v209, 1
        %v332 = vsel %vm282, %v329, %v331
        %v333 = vrot.slane %v210, 1
        %v334 = vrot.slane %v211, 1
        %v335 = vsel %vm282, %v333, %v334
        %v336 = vrot.slane %v212, 1
        %v337 = vsel %vm282, %v334, %v336
        %v338 = vrot.slane %v213, 1
        %v339 = vrot.slane %v214, 1
        %v340 = vsel %vm282, %v338, %v339
        %v341 = vrot.slane %v215, 1
        %v342 = vsel %vm282, %v339, %v341
        %v343 = vrot.slane %v216, 1
        %v344 = vrot.slane %v217, 1
        %v345 = vsel %vm282, %v343, %v344
        %v346 = vrot.slane %v218, 1
        %v347 = vsel %vm282, %v344, %v346
        %v348 = vrot.slane %v219, 1
        %v349 = vrot.slane %v220, 1
        %v350 = vsel %vm282, %v348, %v349
        %v351 = vrot.slane %v221, 1
        %v352 = vsel %vm282, %v349, %v351
        %v353 = vrot.slane %v222, 1
        %v354 = vrot.slane %v223, 1
        %v355 = vsel %vm282, %v353, %v354
        %v356 = vrot.slane %v224, 1
        %v357 = vsel %vm282, %v354, %v356
        %v358 = vrot.slane %v225, 1
        %v359 = vrot.slane %v226, 1
        %v360 = vsel %vm282, %v358, %v359
        %v361 = vrot.slane %v227, 1
        %v362 = vsel %vm282, %v359, %v361
        %vm395 = vcmask 1045504
        %v396 = vrot.slane %v180, 2
        %v397 = vrot.slane %v181, 2
        %v398 = vsel %vm395, %v396, %v397
        %v399 = vrot.slane %v182, 2
        %v400 = vsel %vm395, %v397, %v399
        %v401 = vrot.slane %v183, 2
        %v402 = vrot.slane %v184, 2
        %v403 = vsel %vm395, %v401, %v402
        %v404 = vrot.slane %v185, 2
        %v405 = vsel %vm395, %v402, %v404
        %v406 = vrot.slane %v186, 2
        %v407 = vrot.slane %v187, 2
        %v408 = vsel %vm395, %v406, %v407
        %v409 = vrot.slane %v188, 2
        %v410 = vsel %vm395, %v407, %v409
        %v411 = vrot.slane %v189, 2
        %v412 = vrot.slane %v190, 2
        %v413 = vsel %vm395, %v411, %v412
        %v414 = vrot.slane %v191, 2
        %v415 = vsel %vm395, %v412, %v414
        %v416 = vrot.slane %v192, 2
        %v417 = vrot.slane %v193, 2
        %v418 = vsel %vm395, %v416, %v417
        %v419 = vrot.slane %v194, 2
        %v420 = vsel %vm395, %v417, %v419
        %v421 = vrot.slane %v195, 2
        %v422 = vrot.slane %v196, 2
        %v423 = vsel %vm395, %v421, %v422
        %v424 = vrot.slane %v197, 2
        %v425 = vsel %vm395, %v422, %v424
        %v426 = vrot.slane %v198, 2
        %v427 = vrot.slane %v199, 2
        %v428 = vsel %vm395, %v426, %v427
        %v429 = vrot.slane %v200, 2
        %v430 = vsel %vm395, %v427, %v429
        %v431 = vrot.slane %v201, 2
        %v432 = vrot.slane %v202, 2
        %v433 = vsel %vm395, %v431, %v432
        %v434 = vrot.slane %v203, 2
        %v435 = vsel %vm395, %v432, %v434
        %v436 = vrot.slane %v204, 2
        %v437 = vrot.slane %v205, 2
        %v438 = vsel %vm395, %v436, %v437
        %v439 = vrot.slane %v206, 2
        %v440 = vsel %vm395, %v437, %v439
        %v441 = vrot.slane %v207, 2
        %v442 = vrot.slane %v208, 2
        %v443 = vsel %vm395, %v441, %v442
        %v444 = vrot.slane %v209, 2
        %v445 = vsel %vm395, %v442, %v444
        %v446 = vrot.slane %v210, 2
        %v447 = vrot.slane %v211, 2
        %v448 = vsel %vm395, %v446, %v447
        %v449 = vrot.slane %v212, 2
        %v450 = vsel %vm395, %v447, %v449
        %v451 = vrot.slane %v213, 2
        %v452 = vrot.slane %v214, 2
        %v453 = vsel %vm395, %v451, %v452
        %v454 = vrot.slane %v215, 2
        %v455 = vsel %vm395, %v452, %v454
        %v456 = vrot.slane %v216, 2
        %v457 = vrot.slane %v217, 2
        %v458 = vsel %vm395, %v456, %v457
        %v459 = vrot.slane %v218, 2
        %v460 = vsel %vm395, %v457, %v459
        %v461 = vrot.slane %v219, 2
        %v462 = vrot.slane %v220, 2
        %v463 = vsel %vm395, %v461, %v462
        %v464 = vrot.slane %v221, 2
        %v465 = vsel %vm395, %v462, %v464
        %v466 = vrot.slane %v222, 2
        %v467 = vrot.slane %v223, 2
        %v468 = vsel %vm395, %v466, %v467
        %v469 = vrot.slane %v224, 2
        %v470 = vsel %vm395, %v467, %v469
        %v471 = vrot.slane %v225, 2
        %v472 = vrot.slane %v226, 2
        %v473 = vsel %vm395, %v471, %v472
        %v474 = vrot.slane %v227, 2
        %v475 = vsel %vm395, %v472, %v474
        %v511 = vrot.slane %v228, 1
        %v512 = vrot.slane %v229, 1
        %v513 = vsel %vm282, %v511, %v512
        %v514 = vrot.slane %v230, 1
        %v515 = vsel %vm282, %v512, %v514
        %v518 = vrot.slane %v228, 2
        %v519 = vrot.slane %v229, 2
        %v520 = vsel %vm395, %v518, %v519
        %v521 = vrot.slane %v230, 2
        %v522 = vsel %vm395, %v519, %v521
        %v528 = vrot.slane %v231, 1
        %v529 = vrot.slane %v232, 1
        %v530 = vsel %vm282, %v528, %v529
        %v531 = vrot.slane %v233, 1
        %v532 = vsel %vm282, %v529, %v531
        %v535 = vrot.slane %v231, 2
        %v536 = vrot.slane %v232, 2
        %v537 = vsel %vm395, %v535, %v536
        %v538 = vrot.slane %v233, 2
        %v539 = vsel %vm395, %v536, %v538
        %v542 = vld [vmem:[%s1] sm:$0xff]
        %v543 = vld [vmem:[%s1 + $0x8] sm:$0xff]
        %v544 = vld [vmem:[%s1 + $0x10] sm:$0xff]
        %v545 = vld [vmem:[%s1 + $0x18] sm:$0xff]
        %v546 = vld [vmem:[%s1 + $0x20] sm:$0xff]
        %v547 = vld [vmem:[%s1 + $0x28] sm:$0xff]
        %v548 = vld [vmem:[%s1 + $0x30] sm:$0xff]
        %v549 = vld [vmem:[%s1 + $0x38] sm:$0xff]
        %v550 = vld [vmem:[%s1 + $0x40] sm:$0xff]
        %v551 = vld [vmem:[%s1 + $0x48] sm:$0xff]
        %v552 = vld [vmem:[%s1 + $0x50] sm:$0xff]
        %v553 = vld [vmem:[%s1 + $0x58] sm:$0xff]
        %v554 = vld [vmem:[%s1 + $0x60] sm:$0xff]
        %v555 = vld [vmem:[%s1 + $0x68] sm:$0xff]
        %v556 = vld [vmem:[%s1 + $0x70] sm:$0xff]
        %v557 = vld [vmem:[%s1 + $0x78] sm:$0xff]
        %v558 = vld [vmem:[%s1 + $0x80] sm:$0xff]
        %v559 = vld [vmem:[%s1 + $0x88] sm:$0xff]
        %v560 = vld [vmem:[%s1 + $0x90] sm:$0xff]
        %v561 = vld [vmem:[%s1 + $0x98] sm:$0xff]
        %v562 = vld [vmem:[%s1 + $0xa0] sm:$0xff]
        %v563 = vld [vmem:[%s1 + $0xa8] sm:$0xff]
        %v564 = vld [vmem:[%s1 + $0xb0] sm:$0xff]
        %v565 = vld [vmem:[%s1 + $0xb8] sm:$0xff]
        %v566 = vld [vmem:[%s1 + $0xc0] sm:$0xff]
        %v567 = vld [vmem:[%s1 + $0xc8] sm:$0xff]
        %v568 = vld [vmem:[%s1 + $0xd0] sm:$0xff]
        %v569 = vld [vmem:[%s1 + $0xd8] sm:$0xff]
        %v570 = vld [vmem:[%s1 + $0xe0] sm:$0xff]
        %v571 = vld [vmem:[%s1 + $0xe8] sm:$0xff]
        %v572 = vld [vmem:[%s1 + $0xf0] sm:$0xff]
        %v573 = vld [vmem:[%s1 + $0xf8] sm:$0xff]
        %v574 = vld [vmem:[%s1 + $0x100] sm:$0xff]
        %v575 = vld [vmem:[%s1 + $0x108] sm:$0xff]
        %v576 = vld [vmem:[%s1 + $0x110] sm:$0xff]
        %v577 = vld [vmem:[%s1 + $0x118] sm:$0xff]
        %v578 = vld [vmem:[%s1 + $0x120] sm:$0xff]
        %v579 = vld [vmem:[%s1 + $0x128] sm:$0xff]
        %v580 = vld [vmem:[%s1 + $0x130] sm:$0xff]
        %v581 = vld [vmem:[%s1 + $0x138] sm:$0xff]
        %v582 = vld [vmem:[%s1 + $0x140] sm:$0xff]
        %v583 = vld [vmem:[%s1 + $0x148] sm:$0xff]
        %v584 = vld [vmem:[%s1 + $0x150] sm:$0xff]
        %v585 = vld [vmem:[%s1 + $0x158] sm:$0xff]
        %v586 = vld [vmem:[%s1 + $0x160] sm:$0xff]
        %v587 = vld [vmem:[%s1 + $0x168] sm:$0xff]
        %v588 = vld [vmem:[%s1 + $0x170] sm:$0xff]
        %v589 = vld [vmem:[%s1 + $0x178] sm:$0xff]
        %v590 = vld [vmem:[%s1 + $0x180] sm:$0xff]
        %v591 = vld [vmem:[%s1 + $0x188] sm:$0xff]
        %v592 = vld [vmem:[%s1 + $0x190] sm:$0xff]
        %v593 = vld [vmem:[%s1 + $0x198] sm:$0xff]
        %v594 = vld [vmem:[%s1 + $0x1a0] sm:$0xff]
        %v595 = vld [vmem:[%s1 + $0x1a8] sm:$0xff]
        %v596 = vld [vmem:[%s1 + $0x1b0] sm:$0xff]
        %v597 = vld [vmem:[%s1 + $0x1b8] sm:$0xff]
        %v598 = vld [vmem:[%s1 + $0x1c0] sm:$0xff]
        %v599 = vld [vmem:[%s1 + $0x1c8] sm:$0xff]
        %v600 = vld [vmem:[%s1 + $0x1d0] sm:$0xff]
        %v601 = vld [vmem:[%s1 + $0x1d8] sm:$0xff]
        %v602 = vld [vmem:[%s1 + $0x1e0] sm:$0xff]
        %v603 = vld [vmem:[%s1 + $0x1e8] sm:$0xff]
        %v604 = vld [vmem:[%s1 + $0x1f0] sm:$0xff]
        %v605 = vld [vmem:[%s1 + $0x1f8] sm:$0xff]
        %v606 = vld [vmem:[%s1 + $0x200] sm:$0xff]
        %v607 = vld [vmem:[%s1 + $0x208] sm:$0xff]
        %v608 = vld [vmem:[%s1 + $0x210] sm:$0xff]
        %v609 = vld [vmem:[%s1 + $0x218] sm:$0xff]
        %v610 = vld [vmem:[%s1 + $0x220] sm:$0xff]
        %v611 = vld [vmem:[%s1 + $0x228] sm:$0xff]
        %v612 = vld [vmem:[%s1 + $0x230] sm:$0xff]
        %v613 = vld [vmem:[%s1 + $0x238] sm:$0xff]
        %v614 = vld [vmem:[%s1 + $0x240] sm:$0xff]
        %v615 = vld [vmem:[%s1 + $0x248] sm:$0xff]
        %v616 = vld [vmem:[%s1 + $0x250] sm:$0xff]
        %v617 = vld [vmem:[%s1 + $0x258] sm:$0xff]
        %v618 = vld [vmem:[%s1 + $0x260] sm:$0xff]
        %v619 = vld [vmem:[%s1 + $0x268] sm:$0xff]
        %v620 = vld [vmem:[%s1 + $0x270] sm:$0xff]
        %v621 = vld [vmem:[%s1 + $0x278] sm:$0xff]
        %v622 = vld [vmem:[%s1 + $0x280] sm:$0xff]
        %v623 = vld [vmem:[%s1 + $0x288] sm:$0xff]
        %v624 = vld [vmem:[%s1 + $0x290] sm:$0xff]
        %v625 = vld [vmem:[%s1 + $0x298] sm:$0xff]
        %v626 = vld [vmem:[%s1 + $0x2a0] sm:$0xff]
        %v627 = vld [vmem:[%s1 + $0x2a8] sm:$0xff]
        %v628 = vld [vmem:[%s1 + $0x2b0] sm:$0xff]
        %v629 = vld [vmem:[%s1 + $0x2b8] sm:$0xff]
        %v630 = vld [vmem:[%s1 + $0x2c0] sm:$0xff]
        %v631 = vld [vmem:[%s1 + $0x2c8] sm:$0xff]
        %v632 = vld [vmem:[%s1 + $0x2d0] sm:$0xff]
        %v633 = vld [vmem:[%s1 + $0x2d8] sm:$0xff]
        %v634 = vld [vmem:[%s1 + $0x2e0] sm:$0xff]
        %v635 = vld [vmem:[%s1 + $0x2e8] sm:$0xff]
        %v636 = vld [vmem:[%s1 + $0x2f0] sm:$0xff]
        %v637 = vld [vmem:[%s1 + $0x2f8] sm:$0xff]
        %v638 = vld [vmem:[%s1 + $0x300] sm:$0xff]
        %v639 = vld [vmem:[%s1 + $0x308] sm:$0xff]
        %v640 = vld [vmem:[%s1 + $0x310] sm:$0xff]
        %v641 = vld [vmem:[%s1 + $0x318] sm:$0xff]
        %v642 = vld [vmem:[%s1 + $0x320] sm:$0xff]
        %v643 = vld [vmem:[%s1 + $0x328] sm:$0xff]
        %v644 = vld [vmem:[%s1 + $0x330] sm:$0xff]
        %v645 = vld [vmem:[%s1 + $0x338] sm:$0xff]
        %v646 = vld [vmem:[%s1 + $0x340] sm:$0xff]
        %v647 = vld [vmem:[%s1 + $0x348] sm:$0xff]
        %v648 = vld [vmem:[%s1 + $0x350] sm:$0xff]
        %v649 = vld [vmem:[%s1 + $0x358] sm:$0xff]
        %v650 = vld [vmem:[%s1 + $0x360] sm:$0xff]
        %v651 = vld [vmem:[%s1 + $0x368] sm:$0xff]
        %v652 = vld [vmem:[%s1 + $0x370] sm:$0xff]
        %v653 = vld [vmem:[%s1 + $0x378] sm:$0xff]
        %v654 = vld [vmem:[%s1 + $0x380] sm:$0xff]
        %v655 = vld [vmem:[%s1 + $0x388] sm:$0xff]
        %v656 = vld [vmem:[%s1 + $0x390] sm:$0xff]
        %v657 = vld [vmem:[%s1 + $0x398] sm:$0xff]
        %v658 = vld [vmem:[%s1 + $0x3a0] sm:$0xff]
        %v659 = vld [vmem:[%s1 + $0x3a8] sm:$0xff]
        %v660 = vld [vmem:[%s1 + $0x3b0] sm:$0xff]
        %v661 = vld [vmem:[%s1 + $0x3b8] sm:$0xff]
        %v662 = vld [vmem:[%s1 + $0x3c0] sm:$0xff]
        %v663 = vld [vmem:[%s1 + $0x3c8] sm:$0xff]
        %v664 = vld [vmem:[%s1 + $0x3d0] sm:$0xff]
        %v665 = vld [vmem:[%s1 + $0x3d8] sm:$0xff]
        %v666 = vld [vmem:[%s1 + $0x3e0] sm:$0xff]
        %v667 = vld [vmem:[%s1 + $0x3e8] sm:$0xff]
        %v668 = vld [vmem:[%s1 + $0x3f0] sm:$0xff]
        %v669 = vld [vmem:[%s1 + $0x3f8] sm:$0xff]
        %v670 = vld [vmem:[%s1 + $0x400] sm:$0xff]
        %v671 = vld [vmem:[%s1 + $0x408] sm:$0xff]
        %v672 = vld [vmem:[%s1 + $0x410] sm:$0xff]
        %v673 = vld [vmem:[%s1 + $0x418] sm:$0xff]
        %v674 = vld [vmem:[%s1 + $0x420] sm:$0xff]
        %v675 = vld [vmem:[%s1 + $0x428] sm:$0xff]
        %v676 = vld [vmem:[%s1 + $0x430] sm:$0xff]
        %v677 = vld [vmem:[%s1 + $0x438] sm:$0xff]
        %v678 = vld [vmem:[%s1 + $0x440] sm:$0xff]
        %v679 = vld [vmem:[%s1 + $0x448] sm:$0xff]
        %v680 = vld [vmem:[%s1 + $0x450] sm:$0xff]
        %v681 = vld [vmem:[%s1 + $0x458] sm:$0xff]
        %v682 = vld [vmem:[%s1 + $0x460] sm:$0xff]
        %v683 = vld [vmem:[%s1 + $0x468] sm:$0xff]
        %v684 = vld [vmem:[%s1 + $0x470] sm:$0xff]
        %v685 = vld [vmem:[%s1 + $0x478] sm:$0xff]
        %686 = vmatprep.subr.mxu0 0.0
        %687 = vmatpush1.msra.mxu0 %v542
        %688 = vmatprep.subr.mxu0 0.0
        %689 = vmatpush1.msra.mxu0 %v543
        %690 = vmatprep.subr.mxu0 0.0
        %691 = vmatpush1.msra.mxu0 %v544
        %692 = vmatprep.subr.mxu0 0.0
        %693 = vmatpush1.msra.mxu0 %v545
        %694 = vmatprep.subr.mxu0 0.0
        %695 = vmatpush1.msra.mxu0 %v546
        %696 = vmatprep.subr.mxu0 0.0
        %697 = vmatpush1.msra.mxu0 %v547
        %698 = vmatprep.subr.mxu0 0.0
        %699 = vmatpush1.msra.mxu0 %v548
        %700 = vmatprep.subr.mxu0 0.0
        %701 = vmatpush1.msra.mxu0 %v549
        %702 = vmatprep.subr.mxu0 0.0
        %703 = vmatpush1.msra.mxu0 %v550
        %704 = vmatprep.subr.mxu0 0.0
        %705 = vmatpush1.msra.mxu0 %v551
        %706 = vmatprep.subr.mxu0 0.0
        %707 = vmatpush1.msra.mxu0 %v552
        %708 = vmatprep.subr.mxu0 0.0
        %709 = vmatpush1.msra.mxu0 %v553
        %710 = vmatprep.subr.mxu0 0.0
        %711 = vmatpush1.msra.mxu0 %v554
        %712 = vmatprep.subr.mxu0 0.0
        %713 = vmatpush1.msra.mxu0 %v555
        %714 = vmatprep.subr.mxu0 0.0
        %715 = vmatpush1.msra.mxu0 %v556
        %716 = vmatprep.subr.mxu0 0.0
        %717 = vmatpush1.msra.mxu0 %v557
        %718 = vmatprep.subr.mxu0 0.0
        %719 = vmatpush1.msra.mxu0 %v558
        %720 = vmatprep.subr.mxu0 0.0
        %721 = vmatpush1.msra.mxu0 %v559
        %722 = vmatprep.subr.mxu0 0.0
        %723 = vmatpush1.msra.mxu0 %v560
        %724 = vmatprep.subr.mxu0 0.0
        %725 = vmatpush1.msra.mxu0 %v561
        %726 = vmatprep.subr.mxu0 0.0
        %727 = vmatpush1.msra.mxu0 %v562
        %728 = vmatprep.subr.mxu0 0.0
        %729 = vmatpush1.msra.mxu0 %v563
        %730 = vmatprep.subr.mxu0 0.0
        %731 = vmatpush1.msra.mxu0 %v564
        %732 = vmatprep.subr.mxu0 0.0
        %733 = vmatpush1.msra.mxu0 %v565
        %734 = vmatprep.subr.mxu0 0.0
        %735 = vmatpush1.msra.mxu0 %v566
        %736 = vmatprep.subr.mxu0 0.0
        %737 = vmatpush1.msra.mxu0 %v567
        %738 = vmatprep.subr.mxu0 0.0
        %739 = vmatpush1.msra.mxu0 %v568
        %740 = vmatprep.subr.mxu0 0.0
        %741 = vmatpush1.msra.mxu0 %v569
        %742 = vmatprep.subr.mxu0 0.0
        %743 = vmatpush1.msra.mxu0 %v570
        %744 = vmatprep.subr.mxu0 0.0
        %745 = vmatpush1.msra.mxu0 %v571
        %746 = vmatprep.subr.mxu0 0.0
        %747 = vmatpush1.msra.mxu0 %v572
        %748 = vmatprep.subr.mxu0 0.0
        %749 = vmatpush1.msra.mxu0 %v573
        %750 = vmatprep.mubr.f32.mxu0 %v285
        %751 = vmatmul.mubr.f32.gmra.mrb[0].mxu0 %v180
        %v752 = vpop.f32.mrb[0].mxu0
        %v753 = vadd.f32 0.0, %v752
        %v754 = vpop.f32.mrb[0].mxu0
        %755 = vmatprep.mubr.f32.mxu0 %v287
        %756 = vmatmul.mubr.f32.gmra.mrb[0].mxu0 %v181
        %v757 = vpop.f32.mrb[0].mxu0
        %v758 = vadd.f32 0.0, %v757
        %v759 = vpop.f32.mrb[0].mxu0
        %760 = vmatprep.mubr.f32.mxu0 %v290
        %761 = vmatmul.mubr.f32.gmra.mrb[0].mxu0 %v183
        %v762 = vpop.f32.mrb[0].mxu0
        %v763 = vadd.f32 0.0, %v762
        %v764 = vpop.f32.mrb[0].mxu0
        %765 = vmatprep.mubr.f32.mxu0 %v292
        %766 = vmatmul.mubr.f32.gmra.mrb[0].mxu0 %v184
        %v767 = vpop.f32.mrb[0].mxu0
        %v768 = vadd.f32 0.0, %v767
        %v769 = vpop.f32.mrb[0].mxu0
        %770 = vmatprep.mubr.f32.mxu0 %v295
        %771 = vmatmul.mubr.f32.gmra.mrb[0].mxu0 %v186
        %v772 = vpop.f32.mrb[0].mxu0
        %v773 = vadd.f32 0.0, %v772
        %v774 = vpop.f32.mrb[0].mxu0
        %775 = vmatprep.mubr.f32.mxu0 %v297
        %776 = vmatmul.mubr.f32.gmra.mrb[0].mxu0 %v187
        %v777 = vpop.f32.mrb[0].mxu0
        %v778 = vadd.f32 0.0, %v777
        %v779 = vpop.f32.mrb[0].mxu0
        %780 = vmatprep.mubr.f32.mxu0 %v300
        %781 = vmatmul.mubr.f32.gmra.mrb[0].mxu0 %v189
        %v782 = vpop.f32.mrb[0].mxu0
        %v783 = vadd.f32 0.0, %v782
        %v784 = vpop.f32.mrb[0].mxu0
        %785 = vmatprep.mubr.f32.mxu0 %v302
        %786 = vmatmul.mubr.f32.gmra.mrb[0].mxu0 %v190
        %v787 = vpop.f32.mrb[0].mxu0
        %v788 = vadd.f32 0.0, %v787
        %v789 = vpop.f32.mrb[0].mxu0
        %790 = vmatprep.mubr.f32.mxu0 %v305
        %791 = vmatmul.mubr.f32.gmra.mrb[0].mxu0 %v192
        %v792 = vpop.f32.mrb[0].mxu0
        %v793 = vadd.f32 0.0, %v792
        %v794 = vpop.f32.mrb[0].mxu0
        %795 = vmatprep.mubr.f32.mxu0 %v307
        %796 = vmatmul.mubr.f32.gmra.mrb[0].mxu0 %v193
        %v797 = vpop.f32.mrb[0].mxu0
        %v798 = vadd.f32 0.0, %v797
        %v799 = vpop.f32.mrb[0].mxu0
        %800 = vmatprep.mubr.f32.mxu0 %v310
        %801 = vmatmul.mubr.f32.gmra.mrb[0].mxu0 %v195
        %v802 = vpop.f32.mrb[0].mxu0
        %v803 = vadd.f32 0.0, %v802
        %v804 = vpop.f32.mrb[0].mxu0
        %805 = vmatprep.mubr.f32.mxu0 %v312
        %806 = vmatmul.mubr.f32.gmra.mrb[0].mxu0 %v196
        %v807 = vpop.f32.mrb[0].mxu0
        %v808 = vadd.f32 0.0, %v807
        %v809 = vpop.f32.mrb[0].mxu0
        %810 = vmatprep.mubr.f32.mxu0 %v315
        %811 = vmatmul.mubr.f32.gmra.mrb[0].mxu0 %v198
        %v812 = vpop.f32.mrb[0].mxu0
        %v813 = vadd.f32 0.0, %v812
        %v814 = vpop.f32.mrb[0].mxu0
        %815 = vmatprep.mubr.f32.mxu0 %v317
        %816 = vmatmul.mubr.f32.gmra.mrb[0].mxu0 %v199
        %v817 = vpop.f32.mrb[0].mxu0
        %v818 = vadd.f32 0.0, %v817
        %v819 = vpop.f32.mrb[0].mxu0
        %820 = vmatprep.mubr.f32.mxu0 %v320
        %821 = vmatmul.mubr.f32.gmra.mrb[0].mxu0 %v201
        %v822 = vpop.f32.mrb[0].mxu0
        %v823 = vadd.f32 0.0, %v822
        %v824 = vpop.f32.mrb[0].mxu0
        %825 = vmatprep.mubr.f32.mxu0 %v322
        %826 = vmatmul.mubr.f32.gmra.mrb[0].mxu0 %v202
        %v827 = vpop.f32.mrb[0].mxu0
        %v828 = vadd.f32 0.0, %v827
        %v829 = vpop.f32.mrb[0].mxu0
        %830 = vmatprep.mubr.f32.mxu0 %v325
        %831 = vmatmul.mubr.f32.gmra.mrb[0].mxu0 %v204
        %v832 = vpop.f32.mrb[0].mxu0
        %v833 = vadd.f32 0.0, %v832
        %v834 = vpop.f32.mrb[0].mxu0
        %835 = vmatprep.mubr.f32.mxu0 %v327
        %836 = vmatmul.mubr.f32.gmra.mrb[0].mxu0 %v205
        %v837 = vpop.f32.mrb[0].mxu0
        %v838 = vadd.f32 0.0, %v837
        %v839 = vpop.f32.mrb[0].mxu0
        %840 = vmatprep.mubr.f32.mxu0 %v330
        %841 = vmatmul.mubr.f32.gmra.mrb[0].mxu0 %v207
        %v842 = vpop.f32.mrb[0].mxu0
        %v843 = vadd.f32 0.0, %v842
        %v844 = vpop.f32.mrb[0].mxu0
        %845 = vmatprep.mubr.f32.mxu0 %v332
        %846 = vmatmul.mubr.f32.gmra.mrb[0].mxu0 %v208
        %v847 = vpop.f32.mrb[0].mxu0
        %v848 = vadd.f32 0.0, %v847
        %v849 = vpop.f32.mrb[0].mxu0
        %850 = vmatprep.mubr.f32.mxu0 %v335
        %851 = vmatmul.mubr.f32.gmra.mrb[0].mxu0 %v210
        %v852 = vpop.f32.mrb[0].mxu0
        %v853 = vadd.f32 0.0, %v852
        %v854 = vpop.f32.mrb[0].mxu0
        %855 = vmatprep.mubr.f32.mxu0 %v337
        %856 = vmatmul.mubr.f32.gmra.mrb[0].mxu0 %v211
        %v857 = vpop.f32.mrb[0].mxu0
        %v858 = vadd.f32 0.0, %v857
        %v859 = vpop.f32.mrb[0].mxu0
        %860 = vmatprep.mubr.f32.mxu0 %v340
        %861 = vmatmul.mubr.f32.gmra.mrb[0].mxu0 %v213
        %v862 = vpop.f32.mrb[0].mxu0
        %v863 = vadd.f32 0.0, %v862
        %v864 = vpop.f32.mrb[0].mxu0
        %865 = vmatprep.mubr.f32.mxu0 %v342
        %866 = vmatmul.mubr.f32.gmra.mrb[0].mxu0 %v214
        %v867 = vpop.f32.mrb[0].mxu0
        %v868 = vadd.f32 0.0, %v867
        %v869 = vpop.f32.mrb[0].mxu0
        %870 = vmatprep.mubr.f32.mxu0 %v345
        %871 = vmatmul.mubr.f32.gmra.mrb[0].mxu0 %v216
        %v872 = vpop.f32.mrb[0].mxu0
        %v873 = vadd.f32 0.0, %v872
        %v874 = vpop.f32.mrb[0].mxu0
        %875 = vmatprep.mubr.f32.mxu0 %v347
        %876 = vmatmul.mubr.f32.gmra.mrb[0].mxu0 %v217
        %v877 = vpop.f32.mrb[0].mxu0
        %v878 = vadd.f32 0.0, %v877
        %v879 = vpop.f32.mrb[0].mxu0
        %880 = vmatprep.mubr.f32.mxu0 %v350
        %881 = vmatmul.mubr.f32.gmra.mrb[0].mxu0 %v219
        %v882 = vpop.f32.mrb[0].mxu0
        %v883 = vadd.f32 0.0, %v882
        %v884 = vpop.f32.mrb[0].mxu0
        %885 = vmatprep.mubr.f32.mxu0 %v352
        %886 = vmatmul.mubr.f32.gmra.mrb[0].mxu0 %v220
        %v887 = vpop.f32.mrb[0].mxu0
        %v888 = vadd.f32 0.0, %v887
        %v889 = vpop.f32.mrb[0].mxu0
        %890 = vmatprep.mubr.f32.mxu0 %v355
        %891 = vmatmul.mubr.f32.gmra.mrb[0].mxu0 %v222
        %v892 = vpop.f32.mrb[0].mxu0
        %v893 = vadd.f32 0.0, %v892
        %v894 = vpop.f32.mrb[0].mxu0
        %895 = vmatprep.mubr.f32.mxu0 %v357
        %896 = vmatmul.mubr.f32.gmra.mrb[0].mxu0 %v223
        %v897 = vpop.f32.mrb[0].mxu0
        %v898 = vadd.f32 0.0, %v897
        %v899 = vpop.f32.mrb[0].mxu0
        %900 = vmatprep.mubr.f32.mxu0 %v360
        %901 = vmatmul.mubr.f32.gmra.mrb[0].mxu0 %v225
        %v902 = vpop.f32.mrb[0].mxu0
        %v903 = vadd.f32 0.0, %v902
        %v904 = vpop.f32.mrb[0].mxu0
        %905 = vmatprep.mubr.f32.mxu0 %v362
        %906 = vmatmul.mubr.f32.gmra.mrb[0].mxu0 %v226
        %v907 = vpop.f32.mrb[0].mxu0
        %v908 = vadd.f32 0.0, %v907
        %v909 = vpop.f32.mrb[0].mxu0
        %910 = vdwg.mxu0
        %911 = vmatprep.subr.mxu0 0.0
        %912 = vmatpush1.msra.mxu0 %v574
        %913 = vmatprep.subr.mxu0 0.0
        %914 = vmatpush1.msra.mxu0 %v575
        %915 = vmatprep.subr.mxu0 0.0
        %916 = vmatpush1.msra.mxu0 %v576
        %917 = vmatprep.subr.mxu0 0.0
        %918 = vmatpush1.msra.mxu0 %v577
        %919 = vmatprep.subr.mxu0 0.0
        %920 = vmatpush1.msra.mxu0 %v578
        %921 = vmatprep.subr.mxu0 0.0
        %922 = vmatpush1.msra.mxu0 %v579
        %923 = vmatprep.subr.mxu0 0.0
        %924 = vmatpush1.msra.mxu0 %v580
        %925 = vmatprep.subr.mxu0 0.0
        %926 = vmatpush1.msra.mxu0 %v581
        %927 = vmatprep.subr.mxu0 0.0
        %928 = vmatpush1.msra.mxu0 %v582
        %929 = vmatprep.subr.mxu0 0.0
        %930 = vmatpush1.msra.mxu0 %v583
        %931 = vmatprep.subr.mxu0 0.0
        %932 = vmatpush1.msra.mxu0 %v584
        %933 = vmatprep.subr.mxu0 0.0
        %934 = vmatpush1.msra.mxu0 %v585
        %935 = vmatprep.subr.mxu0 0.0
        %936 = vmatpush1.msra.mxu0 %v586
        %937 = vmatprep.subr.mxu0 0.0
        %938 = vmatpush1.msra.mxu0 %v587
        %939 = vmatprep.subr.mxu0 0.0
        %940 = vmatpush1.msra.mxu0 %v588
        %941 = vmatprep.subr.mxu0 0.0
        %942 = vmatpush1.msra.mxu0 %v589
        %943 = vmatprep.subr.mxu0 0.0
        %944 = vmatpush1.msra.mxu0 %v590
        %945 = vmatprep.subr.mxu0 0.0
        %946 = vmatpush1.msra.mxu0 %v591
        %947 = vmatprep.subr.mxu0 0.0
        %948 = vmatpush1.msra.mxu0 %v592
        %949 = vmatprep.subr.mxu0 0.0
        %950 = vmatpush1.msra.mxu0 %v593
        %951 = vmatprep.subr.mxu0 0.0
        %952 = vmatpush1.msra.mxu0 %v594
        %953 = vmatprep.subr.mxu0 0.0
        %954 = vmatpush1.msra.mxu0 %v595
        %955 = vmatprep.subr.mxu0 0.0
        %956 = vmatpush1.msra.mxu0 %v596
        %957 = vmatprep.subr.mxu0 0.0
        %958 = vmatpush1.msra.mxu0 %v597
        %959 = vmatprep.subr.mxu0 0.0
        %960 = vmatpush1.msra.mxu0 %v598
        %961 = vmatprep.subr.mxu0 0.0
        %962 = vmatpush1.msra.mxu0 %v599
        %963 = vmatprep.subr.mxu0 0.0
        %964 = vmatpush1.msra.mxu0 %v600
        %965 = vmatprep.subr.mxu0 0.0
        %966 = vmatpush1.msra.mxu0 %v601
        %967 = vmatprep.subr.mxu0 0.0
        %968 = vmatpush1.msra.mxu0 %v602
        %969 = vmatprep.subr.mxu0 0.0
        %970 = vmatpush1.msra.mxu0 %v603
        %971 = vmatprep.subr.mxu0 0.0
        %972 = vmatpush1.msra.mxu0 %v604
        %973 = vmatprep.subr.mxu0 0.0
        %974 = vmatpush1.msra.mxu0 %v605
        %975 = vmatprep.mubr.f32.mxu0 %v183
        %976 = vmatmul.mubr.f32.gmra.mrb[0].mxu0 %v398
        %v977 = vpop.f32.mrb[0].mxu0
        %v978 = vadd.f32 %v753, %v977
        %v979 = vpop.f32.mrb[0].mxu0
        %980 = vmatprep.mubr.f32.mxu0 %v184
        %981 = vmatmul.mubr.f32.gmra.mrb[0].mxu0 %v400
        %v982 = vpop.f32.mrb[0].mxu0
        %v983 = vadd.f32 %v758, %v982
        %v984 = vpop.f32.mrb[0].mxu0
        %985 = vmatprep.mubr.f32.mxu0 %v186
        %986 = vmatmul.mubr.f32.gmra.mrb[0].mxu0 %v403
        %v987 = vpop.f32.mrb[0].mxu0
        %v988 = vadd.f32 %v763, %v987
        %v989 = vpop.f32.mrb[0].mxu0
        %990 = vmatprep.mubr.f32.mxu0 %v187
        %991 = vmatmul.mubr.f32.gmra.mrb[0].mxu0 %v405
        %v992 = vpop.f32.mrb[0].mxu0
        %v993 = vadd.f32 %v768, %v992
        %v994 = vpop.f32.mrb[0].mxu0
        %995 = vmatprep.mubr.f32.mxu0 %v189
        %996 = vmatmul.mubr.f32.gmra.mrb[0].mxu0 %v408
        %v997 = vpop.f32.mrb[0].mxu0
        %v998 = vadd.f32 %v773, %v997
        %v999 = vpop.f32.mrb[0].mxu0
        %1000 = vmatprep.mubr.f32.mxu0 %v190
        %1001 = vmatmul.mubr.f32.gmra.mrb[0].mxu0 %v410
        %v1002 = vpop.f32.mrb[0].mxu0
        %v1003 = vadd.f32 %v778, %v1002
        %v1004 = vpop.f32.mrb[0].mxu0
        %1005 = vmatprep.mubr.f32.mxu0 %v192
        %1006 = vmatmul.mubr.f32.gmra.mrb[0].mxu0 %v413
        %v1007 = vpop.f32.mrb[0].mxu0
        %v1008 = vadd.f32 %v783, %v1007
        %v1009 = vpop.f32.mrb[0].mxu0
        %1010 = vmatprep.mubr.f32.mxu0 %v193
        %1011 = vmatmul.mubr.f32.gmra.mrb[0].mxu0 %v415
        %v1012 = vpop.f32.mrb[0].mxu0
        %v1013 = vadd.f32 %v788, %v1012
        %v1014 = vpop.f32.mrb[0].mxu0
        %1015 = vmatprep.mubr.f32.mxu0 %v195
        %1016 = vmatmul.mubr.f32.gmra.mrb[0].mxu0 %v418
        %v1017 = vpop.f32.mrb[0].mxu0
        %v1018 = vadd.f32 %v793, %v1017
        %v1019 = vpop.f32.mrb[0].mxu0
        %1020 = vmatprep.mubr.f32.mxu0 %v196
        %1021 = vmatmul.mubr.f32.gmra.mrb[0].mxu0 %v420
        %v1022 = vpop.f32.mrb[0].mxu0
        %v1023 = vadd.f32 %v798, %v1022
        %v1024 = vpop.f32.mrb[0].mxu0
        %1025 = vmatprep.mubr.f32.mxu0 %v198
        %1026 = vmatmul.mubr.f32.gmra.mrb[0].mxu0 %v423
        %v1027 = vpop.f32.mrb[0].mxu0
        %v1028 = vadd.f32 %v803, %v1027
        %v1029 = vpop.f32.mrb[0].mxu0
        %1030 = vmatprep.mubr.f32.mxu0 %v199
        %1031 = vmatmul.mubr.f32.gmra.mrb[0].mxu0 %v425
        %v1032 = vpop.f32.mrb[0].mxu0
        %v1033 = vadd.f32 %v808, %v1032
        %v1034 = vpop.f32.mrb[0].mxu0
        %1035 = vmatprep.mubr.f32.mxu0 %v201
        %1036 = vmatmul.mubr.f32.gmra.mrb[0].mxu0 %v428
        %v1037 = vpop.f32.mrb[0].mxu0
        %v1038 = vadd.f32 %v813, %v1037
        %v1039 = vpop.f32.mrb[0].mxu0
        %1040 = vmatprep.mubr.f32.mxu0 %v202
        %1041 = vmatmul.mubr.f32.gmra.mrb[0].mxu0 %v430
        %v1042 = vpop.f32.mrb[0].mxu0
        %v1043 = vadd.f32 %v818, %v1042
        %v1044 = vpop.f32.mrb[0].mxu0
        %1045 = vmatprep.mubr.f32.mxu0 %v204
        %1046 = vmatmul.mubr.f32.gmra.mrb[0].mxu0 %v433
        %v1047 = vpop.f32.mrb[0].mxu0
        %v1048 = vadd.f32 %v823, %v1047
        %v1049 = vpop.f32.mrb[0].mxu0
        %1050 = vmatprep.mubr.f32.mxu0 %v205
        %1051 = vmatmul.mubr.f32.gmra.mrb[0].mxu0 %v435
        %v1052 = vpop.f32.mrb[0].mxu0
        %v1053 = vadd.f32 %v828, %v1052
        %v1054 = vpop.f32.mrb[0].mxu0
        %1055 = vmatprep.mubr.f32.mxu0 %v207
        %1056 = vmatmul.mubr.f32.gmra.mrb[0].mxu0 %v438
        %v1057 = vpop.f32.mrb[0].mxu0
        %v1058 = vadd.f32 %v833, %v1057
        %v1059 = vpop.f32.mrb[0].mxu0
        %1060 = vmatprep.mubr.f32.mxu0 %v208
        %1061 = vmatmul.mubr.f32.gmra.mrb[0].mxu0 %v440
        %v1062 = vpop.f32.mrb[0].mxu0
        %v1063 = vadd.f32 %v838, %v1062
        %v1064 = vpop.f32.mrb[0].mxu0
        %1065 = vmatprep.mubr.f32.mxu0 %v210
        %1066 = vmatmul.mubr.f32.gmra.mrb[0].mxu0 %v443
        %v1067 = vpop.f32.mrb[0].mxu0
        %v1068 = vadd.f32 %v843, %v1067
        %v1069 = vpop.f32.mrb[0].mxu0
        %1070 = vmatprep.mubr.f32.mxu0 %v211
        %1071 = vmatmul.mubr.f32.gmra.mrb[0].mxu0 %v445
        %v1072 = vpop.f32.mrb[0].mxu0
        %v1073 = vadd.f32 %v848, %v1072
        %v1074 = vpop.f32.mrb[0].mxu0
        %1075 = vmatprep.mubr.f32.mxu0 %v213
        %1076 = vmatmul.mubr.f32.gmra.mrb[0].mxu0 %v448
        %v1077 = vpop.f32.mrb[0].mxu0
        %v1078 = vadd.f32 %v853, %v1077
        %v1079 = vpop.f32.mrb[0].mxu0
        %1080 = vmatprep.mubr.f32.mxu0 %v214
        %1081 = vmatmul.mubr.f32.gmra.mrb[0].mxu0 %v450
        %v1082 = vpop.f32.mrb[0].mxu0
        %v1083 = vadd.f32 %v858, %v1082
        %v1084 = vpop.f32.mrb[0].mxu0
        %1085 = vmatprep.mubr.f32.mxu0 %v216
        %1086 = vmatmul.mubr.f32.gmra.mrb[0].mxu0 %v453
        %v1087 = vpop.f32.mrb[0].mxu0
        %v1088 = vadd.f32 %v863, %v1087
        %v1089 = vpop.f32.mrb[0].mxu0
        %1090 = vmatprep.mubr.f32.mxu0 %v217
        %1091 = vmatmul.mubr.f32.gmra.mrb[0].mxu0 %v455
        %v1092 = vpop.f32.mrb[0].mxu0
        %v1093 = vadd.f32 %v868, %v1092
        %v1094 = vpop.f32.mrb[0].mxu0
        %1095 = vmatprep.mubr.f32.mxu0 %v219
        %1096 = vmatmul.mubr.f32.gmra.mrb[0].mxu0 %v458
        %v1097 = vpop.f32.mrb[0].mxu0
        %v1098 = vadd.f32 %v873, %v1097
        %v1099 = vpop.f32.mrb[0].mxu0
        %1100 = vmatprep.mubr.f32.mxu0 %v220
        %1101 = vmatmul.mubr.f32.gmra.mrb[0].mxu0 %v460
        %v1102 = vpop.f32.mrb[0].mxu0
        %v1103 = vadd.f32 %v878, %v1102
        %v1104 = vpop.f32.mrb[0].mxu0
        %1105 = vmatprep.mubr.f32.mxu0 %v222
        %1106 = vmatmul.mubr.f32.gmra.mrb[0].mxu0 %v463
        %v1107 = vpop.f32.mrb[0].mxu0
        %v1108 = vadd.f32 %v883, %v1107
        %v1109 = vpop.f32.mrb[0].mxu0
        %1110 = vmatprep.mubr.f32.mxu0 %v223
        %1111 = vmatmul.mubr.f32.gmra.mrb[0].mxu0 %v465
        %v1112 = vpop.f32.mrb[0].mxu0
        %v1113 = vadd.f32 %v888, %v1112
        %v1114 = vpop.f32.mrb[0].mxu0
        %1115 = vmatprep.mubr.f32.mxu0 %v225
        %1116 = vmatmul.mubr.f32.gmra.mrb[0].mxu0 %v468
        %v1117 = vpop.f32.mrb[0].mxu0
        %v1118 = vadd.f32 %v893, %v1117
        %v1119 = vpop.f32.mrb[0].mxu0
        %1120 = vmatprep.mubr.f32.mxu0 %v226
        %1121 = vmatmul.mubr.f32.gmra.mrb[0].mxu0 %v470
        %v1122 = vpop.f32.mrb[0].mxu0
        %v1123 = vadd.f32 %v898, %v1122
        %v1124 = vpop.f32.mrb[0].mxu0
        %1125 = vmatprep.mubr.f32.mxu0 %v228
        %1126 = vmatmul.mubr.f32.gmra.mrb[0].mxu0 %v473
        %v1127 = vpop.f32.mrb[0].mxu0
        %v1128 = vadd.f32 %v903, %v1127
        %v1129 = vpop.f32.mrb[0].mxu0
        %1130 = vmatprep.mubr.f32.mxu0 %v229
        %1131 = vmatmul.mubr.f32.gmra.mrb[0].mxu0 %v475
        %v1132 = vpop.f32.mrb[0].mxu0
        %v1133 = vadd.f32 %v908, %v1132
        %v1134 = vpop.f32.mrb[0].mxu0
        %1135 = vdwg.mxu0
        %1136 = vmatprep.subr.mxu0 0.0
        %1137 = vmatpush1.msra.mxu0 %v606
        %1138 = vmatprep.subr.mxu0 0.0
        %1139 = vmatpush1.msra.mxu0 %v607
        %1140 = vmatprep.subr.mxu0 0.0
        %1141 = vmatpush1.msra.mxu0 %v608
        %1142 = vmatprep.subr.mxu0 0.0
        %1143 = vmatpush1.msra.mxu0 %v609
        %1144 = vmatprep.subr.mxu0 0.0
        %1145 = vmatpush1.msra.mxu0 %v610
        %1146 = vmatprep.subr.mxu0 0.0
        %1147 = vmatpush1.msra.mxu0 %v611
        %1148 = vmatprep.subr.mxu0 0.0
        %1149 = vmatpush1.msra.mxu0 %v612
        %1150 = vmatprep.subr.mxu0 0.0
        %1151 = vmatpush1.msra.mxu0 %v613
        %1152 = vmatprep.subr.mxu0 0.0
        %1153 = vmatpush1.msra.mxu0 %v614
        %1154 = vmatprep.subr.mxu0 0.0
        %1155 = vmatpush1.msra.mxu0 %v615
        %1156 = vmatprep.subr.mxu0 0.0
        %1157 = vmatpush1.msra.mxu0 %v616
        %1158 = vmatprep.subr.mxu0 0.0
        %1159 = vmatpush1.msra.mxu0 %v617
        %1160 = vmatprep.subr.mxu0 0.0
        %1161 = vmatpush1.msra.mxu0 %v618
        %1162 = vmatprep.subr.mxu0 0.0
        %1163 = vmatpush1.msra.mxu0 %v619
        %1164 = vmatprep.subr.mxu0 0.0
        %1165 = vmatpush1.msra.mxu0 %v620
        %1166 = vmatprep.subr.mxu0 0.0
        %1167 = vmatpush1.msra.mxu0 %v621
        %1168 = vmatprep.subr.mxu0 0.0
        %1169 = vmatpush1.msra.mxu0 %v622
        %1170 = vmatprep.subr.mxu0 0.0
        %1171 = vmatpush1.msra.mxu0 %v623
        %1172 = vmatprep.subr.mxu0 0.0
        %1173 = vmatpush1.msra.mxu0 %v624
        %1174 = vmatprep.subr.mxu0 0.0
        %1175 = vmatpush1.msra.mxu0 %v625
        %1176 = vmatprep.subr.mxu0 0.0
        %1177 = vmatpush1.msra.mxu0 %v626
        %1178 = vmatprep.subr.mxu0 0.0
        %1179 = vmatpush1.msra.mxu0 %v627
        %1180 = vmatprep.subr.mxu0 0.0
        %1181 = vmatpush1.msra.mxu0 %v628
        %1182 = vmatprep.subr.mxu0 0.0
        %1183 = vmatpush1.msra.mxu0 %v629
        %1184 = vmatprep.subr.mxu0 0.0
        %1185 = vmatpush1.msra.mxu0 %v630
        %1186 = vmatprep.subr.mxu0 0.0
        %1187 = vmatpush1.msra.mxu0 %v631
        %1188 = vmatprep.subr.mxu0 0.0
        %1189 = vmatpush1.msra.mxu0 %v632
        %1190 = vmatprep.subr.mxu0 0.0
        %1191 = vmatpush1.msra.mxu0 %v633
        %1192 = vmatprep.subr.mxu0 0.0
        %1193 = vmatpush1.msra.mxu0 %v634
        %1194 = vmatprep.subr.mxu0 0.0
        %1195 = vmatpush1.msra.mxu0 %v635
        %1196 = vmatprep.subr.mxu0 0.0
        %1197 = vmatpush1.msra.mxu0 %v636
        %1198 = vmatprep.subr.mxu0 0.0
        %1199 = vmatpush1.msra.mxu0 %v637
        %1200 = vmatprep.mubr.f32.mxu0 %v403
        %1201 = vmatmul.mubr.f32.gmra.mrb[0].mxu0 %v290
        %v1202 = vpop.f32.mrb[0].mxu0
        %v1203 = vadd.f32 %v978, %v1202
        %v1204 = vpop.f32.mrb[0].mxu0
        %1205 = vmatprep.mubr.f32.mxu0 %v405
        %1206 = vmatmul.mubr.f32.gmra.mrb[0].mxu0 %v292
        %v1207 = vpop.f32.mrb[0].mxu0
        %v1208 = vadd.f32 %v983, %v1207
        %v1209 = vpop.f32.mrb[0].mxu0
        %1210 = vmatprep.mubr.f32.mxu0 %v408
        %1211 = vmatmul.mubr.f32.gmra.mrb[0].mxu0 %v295
        %v1212 = vpop.f32.mrb[0].mxu0
        %v1213 = vadd.f32 %v988, %v1212
        %v1214 = vpop.f32.mrb[0].mxu0
        %1215 = vmatprep.mubr.f32.mxu0 %v410
        %1216 = vmatmul.mubr.f32.gmra.mrb[0].mxu0 %v297
        %v1217 = vpop.f32.mrb[0].mxu0
        %v1218 = vadd.f32 %v993, %v1217
        %v1219 = vpop.f32.mrb[0].mxu0
        %1220 = vmatprep.mubr.f32.mxu0 %v413
        %1221 = vmatmul.mubr.f32.gmra.mrb[0].mxu0 %v300
        %v1222 = vpop.f32.mrb[0].mxu0
        %v1223 = vadd.f32 %v998, %v1222
        %v1224 = vpop.f32.mrb[0].mxu0
        %1225 = vmatprep.mubr.f32.mxu0 %v415
        %1226 = vmatmul.mubr.f32.gmra.mrb[0].mxu0 %v302
        %v1227 = vpop.f32.mrb[0].mxu0
        %v1228 = vadd.f32 %v1003, %v1227
        %v1229 = vpop.f32.mrb[0].mxu0
        %1230 = vmatprep.mubr.f32.mxu0 %v418
        %1231 = vmatmul.mubr.f32.gmra.mrb[0].mxu0 %v305
        %v1232 = vpop.f32.mrb[0].mxu0
        %v1233 = vadd.f32 %v1008, %v1232
        %v1234 = vpop.f32.mrb[0].mxu0
        %1235 = vmatprep.mubr.f32.mxu0 %v420
        %1236 = vmatmul.mubr.f32.gmra.mrb[0].mxu0 %v307
        %v1237 = vpop.f32.mrb[0].mxu0
        %v1238 = vadd.f32 %v1013, %v1237
        %v1239 = vpop.f32.mrb[0].mxu0
        %1240 = vmatprep.mubr.f32.mxu0 %v423
        %1241 = vmatmul.mubr.f32.gmra.mrb[0].mxu0 %v310
        %v1242 = vpop.f32.mrb[0].mxu0
        %v1243 = vadd.f32 %v1018, %v1242
        %v1244 = vpop.f32.mrb[0].mxu0
        %1245 = vmatprep.mubr.f32.mxu0 %v425
        %1246 = vmatmul.mubr.f32.gmra.mrb[0].mxu0 %v312
        %v1247 = vpop.f32.mrb[0].mxu0
        %v1248 = vadd.f32 %v1023, %v1247
        %v1249 = vpop.f32.mrb[0].mxu0
        %1250 = vmatprep.mubr.f32.mxu0 %v428
        %1251 = vmatmul.mubr.f32.gmra.mrb[0].mxu0 %v315
        %v1252 = vpop.f32.mrb[0].mxu0
        %v1253 = vadd.f32 %v1028, %v1252
        %v1254 = vpop.f32.mrb[0].mxu0
        %1255 = vmatprep.mubr.f32.mxu0 %v430
        %1256 = vmatmul.mubr.f32.gmra.mrb[0].mxu0 %v317
        %v1257 = vpop.f32.mrb[0].mxu0
        %v1258 = vadd.f32 %v1033, %v1257
        %v1259 = vpop.f32.mrb[0].mxu0
        %1260 = vmatprep.mubr.f32.mxu0 %v433
        %1261 = vmatmul.mubr.f32.gmra.mrb[0].mxu0 %v320
        %v1262 = vpop.f32.mrb[0].mxu0
        %v1263 = vadd.f32 %v1038, %v1262
        %v1264 = vpop.f32.mrb[0].mxu0
        %1265 = vmatprep.mubr.f32.mxu0 %v435
        %1266 = vmatmul.mubr.f32.gmra.mrb[0].mxu0 %v322
        %v1267 = vpop.f32.mrb[0].mxu0
        %v1268 = vadd.f32 %v1043, %v1267
        %v1269 = vpop.f32.mrb[0].mxu0
        %1270 = vmatprep.mubr.f32.mxu0 %v438
        %1271 = vmatmul.mubr.f32.gmra.mrb[0].mxu0 %v325
        %v1272 = vpop.f32.mrb[0].mxu0
        %v1273 = vadd.f32 %v1048, %v1272
        %v1274 = vpop.f32.mrb[0].mxu0
        %1275 = vmatprep.mubr.f32.mxu0 %v440
        %1276 = vmatmul.mubr.f32.gmra.mrb[0].mxu0 %v327
        %v1277 = vpop.f32.mrb[0].mxu0
        %v1278 = vadd.f32 %v1053, %v1277
        %v1279 = vpop.f32.mrb[0].mxu0
        %1280 = vmatprep.mubr.f32.mxu0 %v443
        %1281 = vmatmul.mubr.f32.gmra.mrb[0].mxu0 %v330
        %v1282 = vpop.f32.mrb[0].mxu0
        %v1283 = vadd.f32 %v1058, %v1282
        %v1284 = vpop.f32.mrb[0].mxu0
        %1285 = vmatprep.mubr.f32.mxu0 %v445
        %1286 = vmatmul.mubr.f32.gmra.mrb[0].mxu0 %v332
        %v1287 = vpop.f32.mrb[0].mxu0
        %v1288 = vadd.f32 %v1063, %v1287
        %v1289 = vpop.f32.mrb[0].mxu0
        %1290 = vmatprep.mubr.f32.mxu0 %v448
        %1291 = vmatmul.mubr.f32.gmra.mrb[0].mxu0 %v335
        %v1292 = vpop.f32.mrb[0].mxu0
        %v1293 = vadd.f32 %v1068, %v1292
        %v1294 = vpop.f32.mrb[0].mxu0
        %1295 = vmatprep.mubr.f32.mxu0 %v450
        %1296 = vmatmul.mubr.f32.gmra.mrb[0].mxu0 %v337
        %v1297 = vpop.f32.mrb[0].mxu0
        %v1298 = vadd.f32 %v1073, %v1297
        %v1299 = vpop.f32.mrb[0].mxu0
        %1300 = vmatprep.mubr.f32.mxu0 %v453
        %1301 = vmatmul.mubr.f32.gmra.mrb[0].mxu0 %v340
        %v1302 = vpop.f32.mrb[0].mxu0
        %v1303 = vadd.f32 %v1078, %v1302
        %v1304 = vpop.f32.mrb[0].mxu0
        %1305 = vmatprep.mubr.f32.mxu0 %v455
        %1306 = vmatmul.mubr.f32.gmra.mrb[0].mxu0 %v342
        %v1307 = vpop.f32.mrb[0].mxu0
        %v1308 = vadd.f32 %v1083, %v1307
        %v1309 = vpop.f32.mrb[0].mxu0
        %1310 = vmatprep.mubr.f32.mxu0 %v458
        %1311 = vmatmul.mubr.f32.gmra.mrb[0].mxu0 %v345
        %v1312 = vpop.f32.mrb[0].mxu0
        %v1313 = vadd.f32 %v1088, %v1312
        %v1314 = vpop.f32.mrb[0].mxu0
        %1315 = vmatprep.mubr.f32.mxu0 %v460
        %1316 = vmatmul.mubr.f32.gmra.mrb[0].mxu0 %v347
        %v1317 = vpop.f32.mrb[0].mxu0
        %v1318 = vadd.f32 %v1093, %v1317
        %v1319 = vpop.f32.mrb[0].mxu0
        %1320 = vmatprep.mubr.f32.mxu0 %v463
        %1321 = vmatmul.mubr.f32.gmra.mrb[0].mxu0 %v350
        %v1322 = vpop.f32.mrb[0].mxu0
        %v1323 = vadd.f32 %v1098, %v1322
        %v1324 = vpop.f32.mrb[0].mxu0
        %1325 = vmatprep.mubr.f32.mxu0 %v465
        %1326 = vmatmul.mubr.f32.gmra.mrb[0].mxu0 %v352
        %v1327 = vpop.f32.mrb[0].mxu0
        %v1328 = vadd.f32 %v1103, %v1327
        %v1329 = vpop.f32.mrb[0].mxu0
        %1330 = vmatprep.mubr.f32.mxu0 %v468
        %1331 = vmatmul.mubr.f32.gmra.mrb[0].mxu0 %v355
        %v1332 = vpop.f32.mrb[0].mxu0
        %v1333 = vadd.f32 %v1108, %v1332
        %v1334 = vpop.f32.mrb[0].mxu0
        %1335 = vmatprep.mubr.f32.mxu0 %v470
        %1336 = vmatmul.mubr.f32.gmra.mrb[0].mxu0 %v357
        %v1337 = vpop.f32.mrb[0].mxu0
        %v1338 = vadd.f32 %v1113, %v1337
        %v1339 = vpop.f32.mrb[0].mxu0
        %1340 = vmatprep.mubr.f32.mxu0 %v473
        %1341 = vmatmul.mubr.f32.gmra.mrb[0].mxu0 %v360
        %v1342 = vpop.f32.mrb[0].mxu0
        %v1343 = vadd.f32 %v1118, %v1342
        %v1344 = vpop.f32.mrb[0].mxu0
        %1345 = vmatprep.mubr.f32.mxu0 %v475
        %1346 = vmatmul.mubr.f32.gmra.mrb[0].mxu0 %v362
        %v1347 = vpop.f32.mrb[0].mxu0
        %v1348 = vadd.f32 %v1123, %v1347
        %v1349 = vpop.f32.mrb[0].mxu0
        %1350 = vmatprep.mubr.f32.mxu0 %v520
        %1351 = vmatmul.mubr.f32.gmra.mrb[0].mxu0 %v513
        %v1352 = vpop.f32.mrb[0].mxu0
        %v1353 = vadd.f32 %v1128, %v1352
        %v1354 = vpop.f32.mrb[0].mxu0
        %1355 = vmatprep.mubr.f32.mxu0 %v522
        %1356 = vmatmul.mubr.f32.gmra.mrb[0].mxu0 %v515
        %v1357 = vpop.f32.mrb[0].mxu0
        %v1358 = vadd.f32 %v1133, %v1357
        %v1359 = vpop.f32.mrb[0].mxu0
        %1360 = vdwg.mxu0
        %1361 = vmatprep.subr.mxu0 0.0
        %1362 = vmatpush1.msra.mxu0 %v638
        %1363 = vmatprep.subr.mxu0 0.0
        %1364 = vmatpush1.msra.mxu0 %v639
        %1365 = vmatprep.subr.mxu0 0.0
        %1366 = vmatpush1.msra.mxu0 %v640
        %1367 = vmatprep.subr.mxu0 0.0
        %1368 = vmatpush1.msra.mxu0 %v641
        %1369 = vmatprep.subr.mxu0 0.0
        %1370 = vmatpush1.msra.mxu0 %v642
        %1371 = vmatprep.subr.mxu0 0.0
        %1372 = vmatpush1.msra.mxu0 %v643
        %1373 = vmatprep.subr.mxu0 0.0
        %1374 = vmatpush1.msra.mxu0 %v644
        %1375 = vmatprep.subr.mxu0 0.0
        %1376 = vmatpush1.msra.mxu0 %v645
        %1377 = vmatprep.subr.mxu0 0.0
        %1378 = vmatpush1.msra.mxu0 %v646
        %1379 = vmatprep.subr.mxu0 0.0
        %1380 = vmatpush1.msra.mxu0 %v647
        %1381 = vmatprep.subr.mxu0 0.0
        %1382 = vmatpush1.msra.mxu0 %v648
        %1383 = vmatprep.subr.mxu0 0.0
        %1384 = vmatpush1.msra.mxu0 %v649
        %1385 = vmatprep.subr.mxu0 0.0
        %1386 = vmatpush1.msra.mxu0 %v650
        %1387 = vmatprep.subr.mxu0 0.0
        %1388 = vmatpush1.msra.mxu0 %v651
        %1389 = vmatprep.subr.mxu0 0.0
        %1390 = vmatpush1.msra.mxu0 %v652
        %1391 = vmatprep.subr.mxu0 0.0
        %1392 = vmatpush1.msra.mxu0 %v653
        %1393 = vmatprep.subr.mxu0 0.0
        %1394 = vmatpush1.msra.mxu0 %v654
        %1395 = vmatprep.subr.mxu0 0.0
        %1396 = vmatpush1.msra.mxu0 %v655
        %1397 = vmatprep.subr.mxu0 0.0
        %1398 = vmatpush1.msra.mxu0 %v656
        %1399 = vmatprep.subr.mxu0 0.0
        %1400 = vmatpush1.msra.mxu0 %v657
        %1401 = vmatprep.subr.mxu0 0.0
        %1402 = vmatpush1.msra.mxu0 %v658
        %1403 = vmatprep.subr.mxu0 0.0
        %1404 = vmatpush1.msra.mxu0 %v659
        %1405 = vmatprep.subr.mxu0 0.0
        %1406 = vmatpush1.msra.mxu0 %v660
        %1407 = vmatprep.subr.mxu0 0.0
        %1408 = vmatpush1.msra.mxu0 %v661
        %1409 = vmatprep.subr.mxu0 0.0
        %1410 = vmatpush1.msra.mxu0 %v662
        %1411 = vmatprep.subr.mxu0 0.0
        %1412 = vmatpush1.msra.mxu0 %v663
        %1413 = vmatprep.subr.mxu0 0.0
        %1414 = vmatpush1.msra.mxu0 %v664
        %1415 = vmatprep.subr.mxu0 0.0
        %1416 = vmatpush1.msra.mxu0 %v665
        %1417 = vmatprep.subr.mxu0 0.0
        %1418 = vmatpush1.msra.mxu0 %v666
        %1419 = vmatprep.subr.mxu0 0.0
        %1420 = vmatpush1.msra.mxu0 %v667
        %1421 = vmatprep.subr.mxu0 0.0
        %1422 = vmatpush1.msra.mxu0 %v668
        %1423 = vmatprep.subr.mxu0 0.0
        %1424 = vmatpush1.msra.mxu0 %v669
        %1425 = vmatprep.mubr.f32.mxu0 %v295
        %1426 = vmatmul.mubr.f32.gmra.mrb[0].mxu0 %v186
        %v1427 = vpop.f32.mrb[0].mxu0
        %v1428 = vadd.f32 %v1203, %v1427
        %v1429 = vpop.f32.mrb[0].mxu0
        %1430 = vmatprep.mubr.f32.mxu0 %v297
        %1431 = vmatmul.mubr.f32.gmra.mrb[0].mxu0 %v187
        %v1432 = vpop.f32.mrb[0].mxu0
        %v1433 = vadd.f32 %v1208, %v1432
        %v1434 = vpop.f32.mrb[0].mxu0
        %1435 = vmatprep.mubr.f32.mxu0 %v300
        %1436 = vmatmul.mubr.f32.gmra.mrb[0].mxu0 %v189
        %v1437 = vpop.f32.mrb[0].mxu0
        %v1438 = vadd.f32 %v1213, %v1437
        %v1439 = vpop.f32.mrb[0].mxu0
        %1440 = vmatprep.mubr.f32.mxu0 %v302
        %1441 = vmatmul.mubr.f32.gmra.mrb[0].mxu0 %v190
        %v1442 = vpop.f32.mrb[0].mxu0
        %v1443 = vadd.f32 %v1218, %v1442
        %v1444 = vpop.f32.mrb[0].mxu0
        %1445 = vmatprep.mubr.f32.mxu0 %v305
        %1446 = vmatmul.mubr.f32.gmra.mrb[0].mxu0 %v192
        %v1447 = vpop.f32.mrb[0].mxu0
        %v1448 = vadd.f32 %v1223, %v1447
        %v1449 = vpop.f32.mrb[0].mxu0
        %1450 = vmatprep.mubr.f32.mxu0 %v307
        %1451 = vmatmul.mubr.f32.gmra.mrb[0].mxu0 %v193
        %v1452 = vpop.f32.mrb[0].mxu0
        %v1453 = vadd.f32 %v1228, %v1452
        %v1454 = vpop.f32.mrb[0].mxu0
        %1455 = vmatprep.mubr.f32.mxu0 %v310
        %1456 = vmatmul.mubr.f32.gmra.mrb[0].mxu0 %v195
        %v1457 = vpop.f32.mrb[0].mxu0
        %v1458 = vadd.f32 %v1233, %v1457
        %v1459 = vpop.f32.mrb[0].mxu0
        %1460 = vmatprep.mubr.f32.mxu0 %v312
        %1461 = vmatmul.mubr.f32.gmra.mrb[0].mxu0 %v196
        %v1462 = vpop.f32.mrb[0].mxu0
        %v1463 = vadd.f32 %v1238, %v1462
        %v1464 = vpop.f32.mrb[0].mxu0
        %1465 = vmatprep.mubr.f32.mxu0 %v315
        %1466 = vmatmul.mubr.f32.gmra.mrb[0].mxu0 %v198
        %v1467 = vpop.f32.mrb[0].mxu0
        %v1468 = vadd.f32 %v1243, %v1467
        %v1469 = vpop.f32.mrb[0].mxu0
        %1470 = vmatprep.mubr.f32.mxu0 %v317
        %1471 = vmatmul.mubr.f32.gmra.mrb[0].mxu0 %v199
        %v1472 = vpop.f32.mrb[0].mxu0
        %v1473 = vadd.f32 %v1248, %v1472
        %v1474 = vpop.f32.mrb[0].mxu0
        %1475 = vmatprep.mubr.f32.mxu0 %v320
        %1476 = vmatmul.mubr.f32.gmra.mrb[0].mxu0 %v201
        %v1477 = vpop.f32.mrb[0].mxu0
        %v1478 = vadd.f32 %v1253, %v1477
        %v1479 = vpop.f32.mrb[0].mxu0
        %1480 = vmatprep.mubr.f32.mxu0 %v322
        %1481 = vmatmul.mubr.f32.gmra.mrb[0].mxu0 %v202
        %v1482 = vpop.f32.mrb[0].mxu0
        %v1483 = vadd.f32 %v1258, %v1482
        %v1484 = vpop.f32.mrb[0].mxu0
        %1485 = vmatprep.mubr.f32.mxu0 %v325
        %1486 = vmatmul.mubr.f32.gmra.mrb[0].mxu0 %v204
        %v1487 = vpop.f32.mrb[0].mxu0
        %v1488 = vadd.f32 %v1263, %v1487
        %v1489 = vpop.f32.mrb[0].mxu0
        %1490 = vmatprep.mubr.f32.mxu0 %v327
        %1491 = vmatmul.mubr.f32.gmra.mrb[0].mxu0 %v205
        %v1492 = vpop.f32.mrb[0].mxu0
        %v1493 = vadd.f32 %v1268, %v1492
        %v1494 = vpop.f32.mrb[0].mxu0
        %1495 = vmatprep.mubr.f32.mxu0 %v330
        %1496 = vmatmul.mubr.f32.gmra.mrb[0].mxu0 %v207
        %v1497 = vpop.f32.mrb[0].mxu0
        %v1498 = vadd.f32 %v1273, %v1497
        %v1499 = vpop.f32.mrb[0].mxu0
        %1500 = vmatprep.mubr.f32.mxu0 %v332
        %1501 = vmatmul.mubr.f32.gmra.mrb[0].mxu0 %v208
        %v1502 = vpop.f32.mrb[0].mxu0
        %v1503 = vadd.f32 %v1278, %v1502
        %v1504 = vpop.f32.mrb[0].mxu0
        %1505 = vmatprep.mubr.f32.mxu0 %v335
        %1506 = vmatmul.mubr.f32.gmra.mrb[0].mxu0 %v210
        %v1507 = vpop.f32.mrb[0].mxu0
        %v1508 = vadd.f32 %v1283, %v1507
        %v1509 = vpop.f32.mrb[0].mxu0
        %1510 = vmatprep.mubr.f32.mxu0 %v337
        %1511 = vmatmul.mubr.f32.gmra.mrb[0].mxu0 %v211
        %v1512 = vpop.f32.mrb[0].mxu0
        %v1513 = vadd.f32 %v1288, %v1512
        %v1514 = vpop.f32.mrb[0].mxu0
        %1515 = vmatprep.mubr.f32.mxu0 %v340
        %1516 = vmatmul.mubr.f32.gmra.mrb[0].mxu0 %v213
        %v1517 = vpop.f32.mrb[0].mxu0
        %v1518 = vadd.f32 %v1293, %v1517
        %v1519 = vpop.f32.mrb[0].mxu0
        %1520 = vmatprep.mubr.f32.mxu0 %v342
        %1521 = vmatmul.mubr.f32.gmra.mrb[0].mxu0 %v214
        %v1522 = vpop.f32.mrb[0].mxu0
        %v1523 = vadd.f32 %v1298, %v1522
        %v1524 = vpop.f32.mrb[0].mxu0
        %1525 = vmatprep.mubr.f32.mxu0 %v345
        %1526 = vmatmul.mubr.f32.gmra.mrb[0].mxu0 %v216
        %v1527 = vpop.f32.mrb[0].mxu0
        %v1528 = vadd.f32 %v1303, %v1527
        %v1529 = vpop.f32.mrb[0].mxu0
        %1530 = vmatprep.mubr.f32.mxu0 %v347
        %1531 = vmatmul.mubr.f32.gmra.mrb[0].mxu0 %v217
        %v1532 = vpop.f32.mrb[0].mxu0
        %v1533 = vadd.f32 %v1308, %v1532
        %v1534 = vpop.f32.mrb[0].mxu0
        %1535 = vmatprep.mubr.f32.mxu0 %v350
        %1536 = vmatmul.mubr.f32.gmra.mrb[0].mxu0 %v219
        %v1537 = vpop.f32.mrb[0].mxu0
        %v1538 = vadd.f32 %v1313, %v1537
        %v1539 = vpop.f32.mrb[0].mxu0
        %1540 = vmatprep.mubr.f32.mxu0 %v352
        %1541 = vmatmul.mubr.f32.gmra.mrb[0].mxu0 %v220
        %v1542 = vpop.f32.mrb[0].mxu0
        %v1543 = vadd.f32 %v1318, %v1542
        %v1544 = vpop.f32.mrb[0].mxu0
        %1545 = vmatprep.mubr.f32.mxu0 %v355
        %1546 = vmatmul.mubr.f32.gmra.mrb[0].mxu0 %v222
        %v1547 = vpop.f32.mrb[0].mxu0
        %v1548 = vadd.f32 %v1323, %v1547
        %v1549 = vpop.f32.mrb[0].mxu0
        %1550 = vmatprep.mubr.f32.mxu0 %v357
        %1551 = vmatmul.mubr.f32.gmra.mrb[0].mxu0 %v223
        %v1552 = vpop.f32.mrb[0].mxu0
        %v1553 = vadd.f32 %v1328, %v1552
        %v1554 = vpop.f32.mrb[0].mxu0
        %1555 = vmatprep.mubr.f32.mxu0 %v360
        %1556 = vmatmul.mubr.f32.gmra.mrb[0].mxu0 %v225
        %v1557 = vpop.f32.mrb[0].mxu0
        %v1558 = vadd.f32 %v1333, %v1557
        %v1559 = vpop.f32.mrb[0].mxu0
        %1560 = vmatprep.mubr.f32.mxu0 %v362
        %1561 = vmatmul.mubr.f32.gmra.mrb[0].mxu0 %v226
        %v1562 = vpop.f32.mrb[0].mxu0
        %v1563 = vadd.f32 %v1338, %v1562
        %v1564 = vpop.f32.mrb[0].mxu0
        %1565 = vmatprep.mubr.f32.mxu0 %v513
        %1566 = vmatmul.mubr.f32.gmra.mrb[0].mxu0 %v228
        %v1567 = vpop.f32.mrb[0].mxu0
        %v1568 = vadd.f32 %v1343, %v1567
        %v1569 = vpop.f32.mrb[0].mxu0
        %1570 = vmatprep.mubr.f32.mxu0 %v515
        %1571 = vmatmul.mubr.f32.gmra.mrb[0].mxu0 %v229
        %v1572 = vpop.f32.mrb[0].mxu0
        %v1573 = vadd.f32 %v1348, %v1572
        %v1574 = vpop.f32.mrb[0].mxu0
        %1575 = vmatprep.mubr.f32.mxu0 %v530
        %1576 = vmatmul.mubr.f32.gmra.mrb[0].mxu0 %v231
        %v1577 = vpop.f32.mrb[0].mxu0
        %v1578 = vadd.f32 %v1353, %v1577
        %v1579 = vpop.f32.mrb[0].mxu0
        %1580 = vmatprep.mubr.f32.mxu0 %v532
        %1581 = vmatmul.mubr.f32.gmra.mrb[0].mxu0 %v232
        %v1582 = vpop.f32.mrb[0].mxu0
        %v1583 = vadd.f32 %v1358, %v1582
        %v1584 = vpop.f32.mrb[0].mxu0
        %1585 = vdwg.mxu0
        %1586 = vmatprep.subr.mxu0 0.0
        %1587 = vmatpush1.msra.mxu0 %v670
        %1588 = vmatprep.subr.mxu0 0.0
        %1589 = vmatpush1.msra.mxu0 %v671
        %1590 = vmatprep.subr.mxu0 0.0
        %1591 = vmatpush1.msra.mxu0 %v672
        %1592 = vmatprep.subr.mxu0 0.0
        %1593 = vmatpush1.msra.mxu0 %v673
        %1594 = vmatprep.subr.mxu0 0.0
        %1595 = vmatpush1.msra.mxu0 %v674
        %1596 = vmatprep.subr.mxu0 0.0
        %1597 = vmatpush1.msra.mxu0 %v675
        %1598 = vmatprep.subr.mxu0 0.0
        %1599 = vmatpush1.msra.mxu0 %v676
        %1600 = vmatprep.subr.mxu0 0.0
        %1601 = vmatpush1.msra.mxu0 %v677
        %1602 = vmatprep.subr.mxu0 0.0
        %1603 = vmatpush1.msra.mxu0 %v678
        %1604 = vmatprep.subr.mxu0 0.0
        %1605 = vmatpush1.msra.mxu0 %v679
        %1606 = vmatprep.subr.mxu0 0.0
        %1607 = vmatpush1.msra.mxu0 %v680
        %1608 = vmatprep.subr.mxu0 0.0
        %1609 = vmatpush1.msra.mxu0 %v681
        %1610 = vmatprep.subr.mxu0 0.0
        %1611 = vmatpush1.msra.mxu0 %v682
        %1612 = vmatprep.subr.mxu0 0.0
        %1613 = vmatpush1.msra.mxu0 %v683
        %1614 = vmatprep.subr.mxu0 0.0
        %1615 = vmatpush1.msra.mxu0 %v684
        %1616 = vmatprep.subr.mxu0 0.0
        %1617 = vmatpush1.msra.mxu0 %v685
        %1618 = vmatprep.subr.mxu0 0.0
        %1619 = vmatpush1.msra.mxu0 0.0
        %1620 = vmatprep.subr.mxu0 0.0
        %1621 = vmatpush1.msra.mxu0 0.0
        %1622 = vmatprep.subr.mxu0 0.0
        %1623 = vmatpush1.msra.mxu0 0.0
        %1624 = vmatprep.subr.mxu0 0.0
        %1625 = vmatpush1.msra.mxu0 0.0
        %1626 = vmatprep.subr.mxu0 0.0
        %1627 = vmatpush1.msra.mxu0 0.0
        %1628 = vmatprep.subr.mxu0 0.0
        %1629 = vmatpush1.msra.mxu0 0.0
        %1630 = vmatprep.subr.mxu0 0.0
        %1631 = vmatpush1.msra.mxu0 0.0
        %1632 = vmatprep.subr.mxu0 0.0
        %1633 = vmatpush1.msra.mxu0 0.0
        %1634 = vmatprep.subr.mxu0 0.0
        %1635 = vmatpush1.msra.mxu0 0.0
        %1636 = vmatprep.subr.mxu0 0.0
        %1637 = vmatpush1.msra.mxu0 0.0
        %1638 = vmatprep.subr.mxu0 0.0
        %1639 = vmatpush1.msra.mxu0 0.0
        %1640 = vmatprep.subr.mxu0 0.0
        %1641 = vmatpush1.msra.mxu0 0.0
        %1642 = vmatprep.subr.mxu0 0.0
        %1643 = vmatpush1.msra.mxu0 0.0
        %1644 = vmatprep.subr.mxu0 0.0
        %1645 = vmatpush1.msra.mxu0 0.0
        %1646 = vmatprep.subr.mxu0 0.0
        %1647 = vmatpush1.msra.mxu0 0.0
        %1648 = vmatprep.subr.mxu0 0.0
        %1649 = vmatpush1.msra.mxu0 0.0
        %1650 = vmatprep.mubr.f32.mxu0 0.0
        %1651 = vmatmul.mubr.f32.gmra.mrb[0].mxu0 %v408
        %v1652 = vpop.f32.mrb[0].mxu0
        %v1653 = vadd.f32 %v1428, %v1652
        %v1654 = vpop.f32.mrb[0].mxu0
        %1655 = vmatprep.mubr.f32.mxu0 0.0
        %1656 = vmatmul.mubr.f32.gmra.mrb[0].mxu0 %v410
        %v1657 = vpop.f32.mrb[0].mxu0
        %v1658 = vadd.f32 %v1433, %v1657
        %v1659 = vpop.f32.mrb[0].mxu0
        %1660 = vmatprep.mubr.f32.mxu0 0.0
        %1661 = vmatmul.mubr.f32.gmra.mrb[0].mxu0 %v413
        %v1662 = vpop.f32.mrb[0].mxu0
        %v1663 = vadd.f32 %v1438, %v1662
        %v1664 = vpop.f32.mrb[0].mxu0
        %1665 = vmatprep.mubr.f32.mxu0 0.0
        %1666 = vmatmul.mubr.f32.gmra.mrb[0].mxu0 %v415
        %v1667 = vpop.f32.mrb[0].mxu0
        %v1668 = vadd.f32 %v1443, %v1667
        %v1669 = vpop.f32.mrb[0].mxu0
        %1670 = vmatprep.mubr.f32.mxu0 0.0
        %1671 = vmatmul.mubr.f32.gmra.mrb[0].mxu0 %v418
        %v1672 = vpop.f32.mrb[0].mxu0
        %v1673 = vadd.f32 %v1448, %v1672
        %v1674 = vpop.f32.mrb[0].mxu0
        %1675 = vmatprep.mubr.f32.mxu0 0.0
        %1676 = vmatmul.mubr.f32.gmra.mrb[0].mxu0 %v420
        %v1677 = vpop.f32.mrb[0].mxu0
        %v1678 = vadd.f32 %v1453, %v1677
        %v1679 = vpop.f32.mrb[0].mxu0
        %1680 = vmatprep.mubr.f32.mxu0 0.0
        %1681 = vmatmul.mubr.f32.gmra.mrb[0].mxu0 %v423
        %v1682 = vpop.f32.mrb[0].mxu0
        %v1683 = vadd.f32 %v1458, %v1682
        %v1684 = vpop.f32.mrb[0].mxu0
        %1685 = vmatprep.mubr.f32.mxu0 0.0
        %1686 = vmatmul.mubr.f32.gmra.mrb[0].mxu0 %v425
        %v1687 = vpop.f32.mrb[0].mxu0
        %v1688 = vadd.f32 %v1463, %v1687
        %v1689 = vpop.f32.mrb[0].mxu0
        %1690 = vmatprep.mubr.f32.mxu0 0.0
        %1691 = vmatmul.mubr.f32.gmra.mrb[0].mxu0 %v428
        %v1692 = vpop.f32.mrb[0].mxu0
        %v1693 = vadd.f32 %v1468, %v1692
        %v1694 = vpop.f32.mrb[0].mxu0
        %1695 = vmatprep.mubr.f32.mxu0 0.0
        %1696 = vmatmul.mubr.f32.gmra.mrb[0].mxu0 %v430
        %v1697 = vpop.f32.mrb[0].mxu0
        %v1698 = vadd.f32 %v1473, %v1697
        %v1699 = vpop.f32.mrb[0].mxu0
        %1700 = vmatprep.mubr.f32.mxu0 0.0
        %1701 = vmatmul.mubr.f32.gmra.mrb[0].mxu0 %v433
        %v1702 = vpop.f32.mrb[0].mxu0
        %v1703 = vadd.f32 %v1478, %v1702
        %v1704 = vpop.f32.mrb[0].mxu0
        %1705 = vmatprep.mubr.f32.mxu0 0.0
        %1706 = vmatmul.mubr.f32.gmra.mrb[0].mxu0 %v435
        %v1707 = vpop.f32.mrb[0].mxu0
        %v1708 = vadd.f32 %v1483, %v1707
        %v1709 = vpop.f32.mrb[0].mxu0
        %1710 = vmatprep.mubr.f32.mxu0 0.0
        %1711 = vmatmul.mubr.f32.gmra.mrb[0].mxu0 %v438
        %v1712 = vpop.f32.mrb[0].mxu0
        %v1713 = vadd.f32 %v1488, %v1712
        %v1714 = vpop.f32.mrb[0].mxu0
        %1715 = vmatprep.mubr.f32.mxu0 0.0
        %1716 = vmatmul.mubr.f32.gmra.mrb[0].mxu0 %v440
        %v1717 = vpop.f32.mrb[0].mxu0
        %v1718 = vadd.f32 %v1493, %v1717
        %v1719 = vpop.f32.mrb[0].mxu0
        %1720 = vmatprep.mubr.f32.mxu0 0.0
        %1721 = vmatmul.mubr.f32.gmra.mrb[0].mxu0 %v443
        %v1722 = vpop.f32.mrb[0].mxu0
        %v1723 = vadd.f32 %v1498, %v1722
        %v1724 = vpop.f32.mrb[0].mxu0
        %1725 = vmatprep.mubr.f32.mxu0 0.0
        %1726 = vmatmul.mubr.f32.gmra.mrb[0].mxu0 %v445
        %v1727 = vpop.f32.mrb[0].mxu0
        %v1728 = vadd.f32 %v1503, %v1727
        %v1729 = vpop.f32.mrb[0].mxu0
        %1730 = vmatprep.mubr.f32.mxu0 0.0
        %1731 = vmatmul.mubr.f32.gmra.mrb[0].mxu0 %v448
        %v1732 = vpop.f32.mrb[0].mxu0
        %v1733 = vadd.f32 %v1508, %v1732
        %v1734 = vpop.f32.mrb[0].mxu0
        %1735 = vmatprep.mubr.f32.mxu0 0.0
        %1736 = vmatmul.mubr.f32.gmra.mrb[0].mxu0 %v450
        %v1737 = vpop.f32.mrb[0].mxu0
        %v1738 = vadd.f32 %v1513, %v1737
        %v1739 = vpop.f32.mrb[0].mxu0
        %1740 = vmatprep.mubr.f32.mxu0 0.0
        %1741 = vmatmul.mubr.f32.gmra.mrb[0].mxu0 %v453
        %v1742 = vpop.f32.mrb[0].mxu0
        %v1743 = vadd.f32 %v1518, %v1742
        %v1744 = vpop.f32.mrb[0].mxu0
        %1745 = vmatprep.mubr.f32.mxu0 0.0
        %1746 = vmatmul.mubr.f32.gmra.mrb[0].mxu0 %v455
        %v1747 = vpop.f32.mrb[0].mxu0
        %v1748 = vadd.f32 %v1523, %v1747
        %v1749 = vpop.f32.mrb[0].mxu0
        %1750 = vmatprep.mubr.f32.mxu0 0.0
        %1751 = vmatmul.mubr.f32.gmra.mrb[0].mxu0 %v458
        %v1752 = vpop.f32.mrb[0].mxu0
        %v1753 = vadd.f32 %v1528, %v1752
        %v1754 = vpop.f32.mrb[0].mxu0
        %1755 = vmatprep.mubr.f32.mxu0 0.0
        %1756 = vmatmul.mubr.f32.gmra.mrb[0].mxu0 %v460
        %v1757 = vpop.f32.mrb[0].mxu0
        %v1758 = vadd.f32 %v1533, %v1757
        %v1759 = vpop.f32.mrb[0].mxu0
        %1760 = vmatprep.mubr.f32.mxu0 0.0
        %1761 = vmatmul.mubr.f32.gmra.mrb[0].mxu0 %v463
        %v1762 = vpop.f32.mrb[0].mxu0
        %v1763 = vadd.f32 %v1538, %v1762
        %v1764 = vpop.f32.mrb[0].mxu0
        %1765 = vmatprep.mubr.f32.mxu0 0.0
        %1766 = vmatmul.mubr.f32.gmra.mrb[0].mxu0 %v465
        %v1767 = vpop.f32.mrb[0].mxu0
        %v1768 = vadd.f32 %v1543, %v1767
        %v1769 = vpop.f32.mrb[0].mxu0
        %1770 = vmatprep.mubr.f32.mxu0 0.0
        %1771 = vmatmul.mubr.f32.gmra.mrb[0].mxu0 %v468
        %v1772 = vpop.f32.mrb[0].mxu0
        %v1773 = vadd.f32 %v1548, %v1772
        %v1774 = vpop.f32.mrb[0].mxu0
        %1775 = vmatprep.mubr.f32.mxu0 0.0
        %1776 = vmatmul.mubr.f32.gmra.mrb[0].mxu0 %v470
        %v1777 = vpop.f32.mrb[0].mxu0
        %v1778 = vadd.f32 %v1553, %v1777
        %v1779 = vpop.f32.mrb[0].mxu0
        %1780 = vmatprep.mubr.f32.mxu0 0.0
        %1781 = vmatmul.mubr.f32.gmra.mrb[0].mxu0 %v473
        %v1782 = vpop.f32.mrb[0].mxu0
        %v1783 = vadd.f32 %v1558, %v1782
        %v1784 = vpop.f32.mrb[0].mxu0
        %1785 = vmatprep.mubr.f32.mxu0 0.0
        %1786 = vmatmul.mubr.f32.gmra.mrb[0].mxu0 %v475
        %v1787 = vpop.f32.mrb[0].mxu0
        %v1788 = vadd.f32 %v1563, %v1787
        %v1789 = vpop.f32.mrb[0].mxu0
        %1790 = vmatprep.mubr.f32.mxu0 0.0
        %1791 = vmatmul.mubr.f32.gmra.mrb[0].mxu0 %v520
        %v1792 = vpop.f32.mrb[0].mxu0
        %v1793 = vadd.f32 %v1568, %v1792
        %v1794 = vpop.f32.mrb[0].mxu0
        %1795 = vmatprep.mubr.f32.mxu0 0.0
        %1796 = vmatmul.mubr.f32.gmra.mrb[0].mxu0 %v522
        %v1797 = vpop.f32.mrb[0].mxu0
        %v1798 = vadd.f32 %v1573, %v1797
        %v1799 = vpop.f32.mrb[0].mxu0
        %1800 = vmatprep.mubr.f32.mxu0 0.0
        %1801 = vmatmul.mubr.f32.gmra.mrb[0].mxu0 %v537
        %v1802 = vpop.f32.mrb[0].mxu0
        %v1803 = vadd.f32 %v1578, %v1802
        %v1804 = vpop.f32.mrb[0].mxu0
        %1805 = vmatprep.mubr.f32.mxu0 0.0
        %1806 = vmatmul.mubr.f32.gmra.mrb[0].mxu0 %v539
        %v1807 = vpop.f32.mrb[0].mxu0
        %v1808 = vadd.f32 %v1583, %v1807
        %v1809 = vpop.f32.mrb[0].mxu0
        %1810 = vdwg.mxu0
        %1811 = vst [vmem:[%s167] sm:$0xff] %v1653
        %1812 = vst [vmem:[%s167 + $0x8] sm:$0xff] %v1658
        %1813 = vst [vmem:[%s167 + $0x10] sm:$0xff] %v1663
        %1814 = vst [vmem:[%s167 + $0x18] sm:$0xff] %v1668
        %1815 = vst [vmem:[%s167 + $0x20] sm:$0xff] %v1673
        %1816 = vst [vmem:[%s167 + $0x28] sm:$0xff] %v1678
        %1817 = vst [vmem:[%s167 + $0x30] sm:$0xff] %v1683
        %1818 = vst [vmem:[%s167 + $0x38] sm:$0xff] %v1688
        %1819 = vst [vmem:[%s167 + $0x40] sm:$0xff] %v1693
        %1820 = vst [vmem:[%s167 + $0x48] sm:$0xff] %v1698
        %1821 = vst [vmem:[%s167 + $0x50] sm:$0xff] %v1703
        %1822 = vst [vmem:[%s167 + $0x58] sm:$0xff] %v1708
        %1823 = vst [vmem:[%s167 + $0x60] sm:$0xff] %v1713
        %1824 = vst [vmem:[%s167 + $0x68] sm:$0xff] %v1718
        %1825 = vst [vmem:[%s167 + $0x70] sm:$0xff] %v1723
        %1826 = vst [vmem:[%s167 + $0x78] sm:$0xff] %v1728
        %1827 = vst [vmem:[%s167 + $0x80] sm:$0xff] %v1733
        %1828 = vst [vmem:[%s167 + $0x88] sm:$0xff] %v1738
        %1829 = vst [vmem:[%s167 + $0x90] sm:$0xff] %v1743
        %1830 = vst [vmem:[%s167 + $0x98] sm:$0xff] %v1748
        %1831 = vst [vmem:[%s167 + $0xa0] sm:$0xff] %v1753
        %1832 = vst [vmem:[%s167 + $0xa8] sm:$0xff] %v1758
        %1833 = vst [vmem:[%s167 + $0xb0] sm:$0xff] %v1763
        %1834 = vst [vmem:[%s167 + $0xb8] sm:$0xff] %v1768
        %1835 = vst [vmem:[%s167 + $0xc0] sm:$0xff] %v1773
        %1836 = vst [vmem:[%s167 + $0xc8] sm:$0xff] %v1778
        %1837 = vst [vmem:[%s167 + $0xd0] sm:$0xff] %v1783
        %1838 = vst [vmem:[%s167 + $0xd8] sm:$0xff] %v1788
        %1839 = vst [vmem:[%s167 + $0xe0] sm:$0xff] %v1793
        %1840 = vst [vmem:[%s167 + $0xe8] sm:$0xff] %v1798
        %1841 = vst [vmem:[%s167 + $0xf0] sm:$0xff] %v1803
        %1842 = vst [vmem:[%s167 + $0xf8] sm:$0xff] %v1808
        %v1843 = vadd.f32 %v1653, %v1658
        %v1844 = vadd.f32 %v1843, %v1663
        %v1845 = vadd.f32 %v1844, %v1668
        %v1846 = vadd.f32 %v1845, %v1673
        %v1847 = vadd.f32 %v1846, %v1678
        %v1848 = vadd.f32 %v1847, %v1683
        %v1849 = vadd.f32 %v1848, %v1688
        %v1850 = vadd.f32 %v1849, %v1693
        %v1851 = vadd.f32 %v1850, %v1698
        %v1852 = vadd.f32 %v1851, %v1703
        %v1853 = vadd.f32 %v1852, %v1708
        %v1854 = vadd.f32 %v1853, %v1713
        %v1855 = vadd.f32 %v1854, %v1718
        %v1856 = vadd.f32 %v1855, %v1723
        %v1857 = vadd.f32 %v1856, %v1728
        %v1858 = vadd.f32 %v1857, %v1733
        %v1859 = vadd.f32 %v1858, %v1738
        %v1860 = vadd.f32 %v1859, %v1743
        %v1861 = vadd.f32 %v1860, %v1748
        %v1862 = vadd.f32 %v1861, %v1753
        %v1863 = vadd.f32 %v1862, %v1758
        %v1864 = vadd.f32 %v1863, %v1763
        %v1865 = vadd.f32 %v1864, %v1768
        %v1866 = vadd.f32 %v1865, %v1773
        %v1867 = vadd.f32 %v1866, %v1778
        %v1868 = vadd.f32 %v1867, %v1783
        %v1869 = vadd.f32 %v1868, %v1788
        %v1870 = vadd.f32 %v1869, %v1793
        %v1871 = vadd.f32 %v1870, %v1798
        %v1872 = vadd.f32 %v1871, %v1803
        %v1873 = vadd.f32 %v1872, %v1808
        %v1874 = vrot.slane %v1873, 4
        %v1875 = vadd.f32 %v1873, %v1874
        %v1876 = vrot.slane %v1875, 2
        %v1877 = vadd.f32 %v1875, %v1876
        %v1878 = vrot.slane %v1877, 1
        %v1879 = vadd.f32 %v1877, %v1878
        %1880 = vst [vmem:[%s174] sm:$0x1] %v1879
        %v1881 = vmul.f32 %v1653, %v1653
        %v1882 = vmul.f32 %v1658, %v1658
        %v1883 = vmul.f32 %v1663, %v1663
        %v1884 = vmul.f32 %v1668, %v1668
        %v1885 = vmul.f32 %v1673, %v1673
        %v1886 = vmul.f32 %v1678, %v1678
        %v1887 = vmul.f32 %v1683, %v1683
        %v1888 = vmul.f32 %v1688, %v1688
        %v1889 = vmul.f32 %v1693, %v1693
        %v1890 = vmul.f32 %v1698, %v1698
        %v1891 = vmul.f32 %v1703, %v1703
        %v1892 = vmul.f32 %v1708, %v1708
        %v1893 = vmul.f32 %v1713, %v1713
        %v1894 = vmul.f32 %v1718, %v1718
        %v1895 = vmul.f32 %v1723, %v1723
        %v1896 = vmul.f32 %v1728, %v1728
        %v1897 = vmul.f32 %v1733, %v1733
        %v1898 = vmul.f32 %v1738, %v1738
        %v1899 = vmul.f32 %v1743, %v1743
        %v1900 = vmul.f32 %v1748, %v1748
        %v1901 = vmul.f32 %v1753, %v1753
        %v1902 = vmul.f32 %v1758, %v1758
        %v1903 = vmul.f32 %v1763, %v1763
        %v1904 = vmul.f32 %v1768, %v1768
        %v1905 = vmul.f32 %v1773, %v1773
        %v1906 = vmul.f32 %v1778, %v1778
        %v1907 = vmul.f32 %v1783, %v1783
        %v1908 = vmul.f32 %v1788, %v1788
        %v1909 = vmul.f32 %v1793, %v1793
        %v1910 = vmul.f32 %v1798, %v1798
        %v1911 = vmul.f32 %v1803, %v1803
        %v1912 = vmul.f32 %v1808, %v1808
        %v1913 = vadd.f32 %v1881, %v1882
        %v1914 = vadd.f32 %v1913, %v1883
        %v1915 = vadd.f32 %v1914, %v1884
        %v1916 = vadd.f32 %v1915, %v1885
        %v1917 = vadd.f32 %v1916, %v1886
        %v1918 = vadd.f32 %v1917, %v1887
        %v1919 = vadd.f32 %v1918, %v1888
        %v1920 = vadd.f32 %v1919, %v1889
        %v1921 = vadd.f32 %v1920, %v1890
        %v1922 = vadd.f32 %v1921, %v1891
        %v1923 = vadd.f32 %v1922, %v1892
        %v1924 = vadd.f32 %v1923, %v1893
        %v1925 = vadd.f32 %v1924, %v1894
        %v1926 = vadd.f32 %v1925, %v1895
        %v1927 = vadd.f32 %v1926, %v1896
        %v1928 = vadd.f32 %v1927, %v1897
        %v1929 = vadd.f32 %v1928, %v1898
        %v1930 = vadd.f32 %v1929, %v1899
        %v1931 = vadd.f32 %v1930, %v1900
        %v1932 = vadd.f32 %v1931, %v1901
        %v1933 = vadd.f32 %v1932, %v1902
        %v1934 = vadd.f32 %v1933, %v1903
        %v1935 = vadd.f32 %v1934, %v1904
        %v1936 = vadd.f32 %v1935, %v1905
        %v1937 = vadd.f32 %v1936, %v1906
        %v1938 = vadd.f32 %v1937, %v1907
        %v1939 = vadd.f32 %v1938, %v1908
        %v1940 = vadd.f32 %v1939, %v1909
        %v1941 = vadd.f32 %v1940, %v1910
        %v1942 = vadd.f32 %v1941, %v1911
        %v1943 = vadd.f32 %v1942, %v1912
        %v1944 = vrot.slane %v1943, 4
        %v1945 = vadd.f32 %v1943, %v1944
        %v1946 = vrot.slane %v1945, 2
        %v1947 = vadd.f32 %v1945, %v1946
        %v1948 = vrot.slane %v1947, 1
        %v1949 = vadd.f32 %v1947, %v1948
        %1950 = vst [vmem:[%s174 + $0x1] sm:$0x1] %v1949
        %s1951 = sand.u32 %s76, 1
        %s1952 = scalar_lea.sflag [#allocation3], %s1951
        %s1953 = sand.u32 %s76, 1
        %s1954 = smul.addr %s1953, 256
        %s1955 = scalar_lea.vmem [#allocation2], %s1954
        %s1956 = sand.u32 %s102, 1
        %s1957 = scalar_lea.sflag [#allocation5], %s1956
        %s1958 = sand.u32 %s102, 1
        %s1959 = smul.addr %s1958, 2
        %s1960 = scalar_lea.vmem [#allocation4], %s1959
        // Predicated region
        $region29: #{tpu_custom_call.1} parent=27 // pred_check
          %p1961 = pneg %p86
        $region30: #{tpu_custom_call.1} parent=27 // pred_check_branch
          %1963 = sbr.rel (%p1961) target = $region32
        $region31: #{tpu_custom_call.1} parent=27 // pred_region
          %s1965 = ssub.s32 4096, 4096
          %1966 = vsyncadd %s1952, %s1965
          %s1967 = smul.addr %s21, 32
          %s1968 = smul.addr %s1967, 128
          %s1969 = scalar_lea.hbm %s2, %s1968
          %s1970 = sshll.u32 %s1955, 4
          %s1971 = int_to_ptr.vmem [resolvable:$true] %s1970
          %1976 = dma.vmem_to_hbm [thread:$0]  %s1971, 4096, %s1969, %s1952, 128, 128, 8
        $region32: #{tpu_custom_call.1} parent=27 // pred_fallthru
          _
        // Predicated region
        $region33: #{tpu_custom_call.1} parent=27 // pred_check
          %p1977 = pneg %p112
        $region34: #{tpu_custom_call.1} parent=27 // pred_check_branch
          %1979 = sbr.rel (%p1977) target = $region36
        $region35: #{tpu_custom_call.1} parent=27 // pred_region
          %s1981 = ssub.s32 32, 32
          %1982 = vsyncadd %s1957, %s1981
          %s1983 = smul.addr %s21, 32
          %s1984 = scalar_lea.hbm %s3, %s1983
          %s1986 = sshll.u32 %s1960, 4
          %s1987 = int_to_ptr.vmem [resolvable:$true] %s1986
          %1989 = dma.vmem_to_hbm [thread:$0]  %s1987, 32, %s1984, %s1957
        $region36: #{tpu_custom_call.1} parent=27 // pred_fallthru
          _
      $region28: #{tpu_custom_call.1} parent=5 // pred_fallthru
        _
      %p1990 = scmp.le.s32.totalorder 2, %s16
      // Predicated region
      $region37: #{tpu_custom_call.1} parent=5 // pred_check
        %p1991 = pneg %p1990
      $region38: #{tpu_custom_call.1} parent=5 // pred_check_branch
        %1993 = sbr.rel (%p1991) target = $region40
      $region39: #{tpu_custom_call.1} parent=5 // pred_region
        %s1994 = ssub.s32 %s16, 2
        // Predicated region
        $region41: #{tpu_custom_call.1} parent=39 // pred_check
          %p1995 = pneg %p92
        $region42: #{tpu_custom_call.1} parent=39 // pred_check_branch
          %1997 = sbr.rel (%p1995) target = $region44
        $region43: #{tpu_custom_call.1} parent=39 // pred_region
          %s1998 = sand.u32 %s77, 1
          %s1999 = scalar_lea.sflag [#allocation3], %s1998
          %s2000 = sand.u32 %s77, 1
          %s2001 = smul.addr %s2000, 256
          %s2002 = scalar_lea.vmem [#allocation2], %s2001
          %2003 = dma.done %s1999, 4096
        $region44: #{tpu_custom_call.1} parent=39 // pred_fallthru
          _
        // Predicated region
        $region45: #{tpu_custom_call.1} parent=39 // pred_check
          %p2004 = pneg %p118
        $region46: #{tpu_custom_call.1} parent=39 // pred_check_branch
          %2006 = sbr.rel (%p2004) target = $region48
        $region47: #{tpu_custom_call.1} parent=39 // pred_region
          %s2007 = sand.u32 %s103, 1
          %s2008 = scalar_lea.sflag [#allocation5], %s2007
          %s2009 = sand.u32 %s103, 1
          %s2010 = smul.addr %s2009, 2
          %s2011 = scalar_lea.vmem [#allocation4], %s2010
          %2012 = dma.done %s2008, 32
        $region48: #{tpu_custom_call.1} parent=39 // pred_fallthru
          _
      $region40: #{tpu_custom_call.1} parent=5 // pred_fallthru
        _
    $region6: #{tpu_custom_call.1} parent=1 // loop_footer
      %s20 = sadd.s32 1, %s16
    $region7: #{tpu_custom_call.1} parent=1 // loop_footer_branch
      %15 = sbr.rel target = $region3
    $region8: #{tpu_custom_call.1} parent=1 // loop_exit
      _
    %2013 = vsyncpa [#allocation3], 1
    %s2014 = scalar_lea.sflag [#allocation3], 1
    %2015 = vsyncpa %s2014, 1
    %2016 = vsyncpa [#allocation5], 1
    %s2017 = scalar_lea.sflag [#allocation5], 1
    %2018 = vsyncpa %s2017, 1

</llo_original>
